<compile_context>
chip_gen: v6e
topology: v6e:2x2x1
jax: 0.10.0
libtpu: 0.0.40
codegen_flags: <defaults>
</compile_context>

<pallas_src>
import jax
import jax.numpy as jnp
from jax.experimental import pallas as pl
from jax.experimental.pallas import tpu as pltpu

VISCOSITY = 1.0
INV_VISCOSITY = 1.0 / VISCOSITY


def sc_network_kernel(xa_ref, fT_ref, w1a_ref, w2t_ref, b2_ref, w3t_ref, b3_ref,
                      vT_ref):
    xa = xa_ref[...]                     # (5, Bt): rows = [dx, dy, dz, r, 1]
    fT = fT_ref[...]                     # (6, Bt)

    # --- MLP, batch on the MXU N axis.  Layer-1 bias is folded into the matmul
    # via the constant-1 input row / extra weight column (no VALU bias add).
    h1 = jnp.maximum(
        jnp.dot(w1a_ref[...], xa, preferred_element_type=jnp.float32), 0.0)       # (32,Bt)
    h2 = jnp.maximum(
        jnp.dot(w2t_ref[...], h1, preferred_element_type=jnp.float32) + b2_ref[...], 0.0)  # (64,Bt)
    sc = jnp.tanh(
        jnp.dot(w3t_ref[...], h2, preferred_element_type=jnp.float32) + b3_ref[...])       # (5,Bt)
    if INV_VISCOSITY != 1.0:             # trace-time constant; everything is linear in sc
        sc = sc * jnp.float32(INV_VISCOSITY)

    # --- Normalized direction, stacked as one (3,Bt) op.
    inv_r = pl.reciprocal(xa[3:4, :], approx=False)   # (1, Bt), exact
    d = xa[0:3, :] * inv_r                            # (3, Bt)
    d_x, d_y, d_z = d[0:1, :], d[1:2, :], d[2:3, :]

    f1 = fT[0:3, :]                                   # (3, Bt)
    f2 = fT[3:6, :]                                   # (3, Bt)
    f10, f11, f12 = f1[0:1, :], f1[1:2, :], f1[2:3, :]
    f20, f21, f22 = f2[0:1, :], f2[1:2, :], f2[2:3, :]

    sc0, sc1 = sc[0:1, :], sc[1:2, :]
    sc2 = sc[2:3, :]
    sc3, sc4 = sc[3:4, :], sc[4:5, :]

    # d . f via one stacked mul + two row adds (same vreg cost as a sublane
    # reduce, zero lowering risk).
    df1 = d * f1
    df2 = d * f2
    ddotf1 = df1[0:1, :] + df1[1:2, :] + df1[2:3, :]  # (1, Bt)
    ddotf2 = df2[0:1, :] + df2[1:2, :] + df2[2:3, :]

    # sc0*ddT + sc1*(I-ddT) applied to f  ==  sc1*f + (sc0-sc1)*(d.f)*d
    t1 = (sc0 - sc1) * ddotf1                         # (1, Bt)
    t2 = (sc3 - sc4) * ddotf2
    base1 = sc1 * f1 + t1 * d                         # (3, Bt)
    base2 = sc4 * f2 + t2 * d                         # (3, Bt)

    # Cross-product terms, pre-scaled by sc2 so each output row is a single add.
    e = sc2 * d                                       # (3, Bt)
    e0, e1, e2 = e[0:1, :], e[1:2, :], e[2:3, :]

    dt = vT_ref.dtype
    # v[:3] = base1 + sc2*(d x f2)   (upper-right block RT^T @ f2)
    vT_ref[0:1, :] = (base1[0:1, :] + (e1 * f22 - e2 * f21)).astype(dt)
    vT_ref[1:2, :] = (base1[1:2, :] + (e2 * f20 - e0 * f22)).astype(dt)
    vT_ref[2:3, :] = (base1[2:3, :] + (e0 * f21 - e1 * f20)).astype(dt)
    # v[3:] = base2 + sc2*(f1 x d)   (lower-left block RT @ f1)
    vT_ref[3:4, :] = (base2[0:1, :] + (f11 * e2 - f12 * e1)).astype(dt)
    vT_ref[4:5, :] = (base2[1:2, :] + (f12 * e0 - f10 * e2)).astype(dt)
    vT_ref[5:6, :] = (base2[2:3, :] + (f10 * e1 - f11 * e0)).astype(dt)


def _round_up(x, m):
    return ((x + m - 1) // m) * m


def sc_network_forward(X, force, params, *, block_b=2048):
    """X: (B,4), force: (B,6) -> velocity (B,6).

    NOTE(perf): the X.T / force.T / result .T transposes are layout plumbing; in
    a production pipeline keep the surrounding program feature-major (or fuse
    the de-transpose into the consumer) so they disappear.  Negligible at the
    test size here.
    """
    w1, b1, w2, b2, w3, b3 = params      # w* stored (in_features, out_features)
    B = X.shape[0]

    # Batch tile: large (amortizes the ~0.35us/step grid overhead), multiple of
    # 128 lanes, sized to split B evenly.  Small B -> single grid step; large B
    # -> many steps so ("parallel",) shards across both TensorCores on v7x.
    bt_cap = max(128, _round_up(block_b, 128))
    n_steps = -(-B // bt_cap)
    bt = _round_up(-(-B // n_steps), 128)
    Bp = n_steps * bt

    if Bp != B:
        # Pad with 1.0 so padded columns never divide by zero; padded columns
        # never mix with valid ones (everything is per-column except the
        # feature-axis matmuls) and are sliced away below.
        X = jnp.pad(X, ((0, Bp - B), (0, 0)), constant_values=1.0)
        force = jnp.pad(force, ((0, Bp - B), (0, 0)))

    # Feature-major layout: batch on the lane axis; constant-1 row folds the
    # layer-1 bias into the first matmul.
    ones = jnp.ones((Bp, 1), X.dtype)
    xa = jnp.concatenate([X, ones], axis=1).T                     # (5, Bp)
    fT = force.T                                                  # (6, Bp)

    w1a = jnp.concatenate([w1.T, b1.reshape(-1, 1)], axis=1)      # (32, 5)
    w2t = w2.T                                                    # (64, 32)
    w3t = w3.T                                                    # (5, 64)
    b2c = b2.reshape(-1, 1)                                       # (64, 1)
    b3c = b3.reshape(-1, 1)                                       # (5, 1)

    vT = pl.pallas_call(
        sc_network_kernel,
        out_shape=jax.ShapeDtypeStruct((6, Bp), jnp.float32),
        grid=(n_steps,),
        in_specs=[
            pl.BlockSpec((5, bt), lambda i: (0, i)),      # xa     : tiled over batch
            pl.BlockSpec((6, bt), lambda i: (0, i)),      # forceT : tiled over batch
            pl.BlockSpec(w1a.shape, lambda i: (0, 0)),    # weights: resident in VMEM
            pl.BlockSpec(w2t.shape, lambda i: (0, 0)),
            pl.BlockSpec(b2c.shape, lambda i: (0, 0)),
            pl.BlockSpec(w3t.shape, lambda i: (0, 0)),
            pl.BlockSpec(b3c.shape, lambda i: (0, 0)),
        ],
        out_specs=pl.BlockSpec((6, bt), lambda i: (0, i)),
        compiler_params=pltpu.CompilerParams(
            dimension_semantics=("parallel",)),           # megacore sharding on v7x
    )(xa, fT, w1a, w2t, b2c, w3t, b3c)

    return vT[:, :B].T                                    # back to (B, 6)


def sc_network_reference(X, force, params):
    """Pure-JAX reference mirroring the PyTorch forward (builds K explicitly)."""
    w1, b1, w2, b2, w3, b3 = params
    h1 = jnp.maximum(X @ w1 + b1, 0.0)
    h2 = jnp.maximum(h1 @ w2 + b2, 0.0)
    sc = jnp.tanh(h2 @ w3 + b3)

    d = X[:, :3] / X[:, 3:4]
    lc = (jnp.zeros((3, 3, 3), jnp.float32)
          .at[0, 1, 2].set(1).at[1, 2, 0].set(1).at[2, 0, 1].set(1)
          .at[0, 2, 1].set(-1).at[2, 1, 0].set(-1).at[1, 0, 2].set(-1))
    L3 = jnp.einsum('ijk,bk->bij', lc, d)
    ddT = jnp.einsum('bi,bj->bij', d, d)
    I = jnp.eye(3, dtype=jnp.float32)[None]
    RT = sc[:, 2, None, None] * L3

    B = X.shape[0]
    K = jnp.zeros((B, 6, 6), jnp.float32)
    K = K.at[:, :3, :3].set(sc[:, 0, None, None] * ddT + sc[:, 1, None, None] * (I - ddT))
    K = K.at[:, 3:, :3].set(RT)
    K = K.at[:, :3, 3:].set(jnp.swapaxes(RT, 1, 2))
    K = K.at[:, 3:, 3:].set(sc[:, 3, None, None] * ddT + sc[:, 4, None, None] * (I - ddT))
    M = K / VISCOSITY
    return jnp.einsum('bij,bj->bi', M, force)


if __name__ == "__main__":
    # B deliberately NOT a multiple of 128, to exercise the padding path.
    B, INPUT_DIM = 600, 4

    key = jax.random.PRNGKey(0)
    ks = jax.random.split(key, 9)

    # Deterministic synthetic parameters (shapes from nn.Linear(4,32)/(32,64)/(64,5)),
    # stored transposed relative to torch: (in_features, out_features).
    w1 = jax.random.normal(ks[0], (INPUT_DIM, 32), jnp.float32) * 0.30
    b1 = jax.random.normal(ks[1], (32,), jnp.float32) * 0.10
    w2 = jax.random.normal(ks[2], (32, 64), jnp.float32) * 0.20
    b2 = jax.random.normal(ks[3], (64,), jnp.float32) * 0.10
    w3 = jax.random.normal(ks[4], (64, 5), jnp.float32) * 0.20
    b3 = jax.random.normal(ks[5], (5,), jnp.float32) * 0.10
    params = (w1, b1, w2, b2, w3, b3)

    # Inputs: X = [d_vec (3) | r (1)], r kept away from zero; force (B, 6).
    d_raw = jax.random.normal(ks[6], (B, 3), jnp.float32)
    r = jax.random.uniform(ks[7], (B, 1), jnp.float32, minval=0.5, maxval=1.5)
    X = jnp.concatenate([d_raw, r], axis=-1)
    force = jax.random.normal(ks[8], (B, 6), jnp.float32)

    v = sc_network_forward(X, force, params)
    jax.block_until_ready(v)

    v_ref = sc_network_reference(X, force, params)
    assert v.shape == (B, 6)
    assert jnp.allclose(v, v_ref, atol=1e-4, rtol=1e-4), (
        f"mismatch: max abs err = {jnp.max(jnp.abs(v - v_ref))}")

    print("KERNEL_OK")
</pallas_src>

<mosaic_0001>
module attributes {stable_mosaic.version = 11 : i64} {
  func.func @sc_network_kernel(%arg0: i32, %arg1: memref<5x640xf32, #tpu.memory_space<vmem>>, %arg2: memref<6x640xf32, #tpu.memory_space<vmem>>, %arg3: memref<32x5xf32, #tpu.memory_space<vmem>>, %arg4: memref<64x32xf32, #tpu.memory_space<vmem>>, %arg5: memref<64x1xf32, #tpu.memory_space<vmem>>, %arg6: memref<5x64xf32, #tpu.memory_space<vmem>>, %arg7: memref<5x1xf32, #tpu.memory_space<vmem>>, %arg8: memref<6x640xf32, #tpu.memory_space<vmem>>) attributes {dimension_semantics = [#tpu.dimension_semantics<parallel>], iteration_bounds = array<i64: 1>, scalar_prefetch = 0 : i64, scratch_operands = 0 : i64, tpu.core_type = #tpu.core_type<tc>, window_params = [{transform_indices = @transform_0, window_bounds = array<i64: 5, 640>}, {transform_indices = @transform_1, window_bounds = array<i64: 6, 640>}, {pipeline_mode = #tpu.pipeline_mode<synchronous>, transform_indices = @transform_2, window_bounds = array<i64: 32, 5>}, {pipeline_mode = #tpu.pipeline_mode<synchronous>, transform_indices = @transform_3, window_bounds = array<i64: 64, 32>}, {pipeline_mode = #tpu.pipeline_mode<synchronous>, transform_indices = @transform_4, window_bounds = array<i64: 64, 1>}, {pipeline_mode = #tpu.pipeline_mode<synchronous>, transform_indices = @transform_5, window_bounds = array<i64: 5, 64>}, {pipeline_mode = #tpu.pipeline_mode<synchronous>, transform_indices = @transform_6, window_bounds = array<i64: 5, 1>}, {transform_indices = @transform_7, window_bounds = array<i64: 6, 640>}]} {
    %c0 = arith.constant 0 : index
    %c0_0 = arith.constant 0 : index
    %0 = vector.load %arg1[%c0, %c0_0] : memref<5x640xf32, #tpu.memory_space<vmem>>, vector<5x640xf32>
    %c0_1 = arith.constant 0 : index
    %c0_2 = arith.constant 0 : index
    %1 = vector.load %arg2[%c0_1, %c0_2] : memref<6x640xf32, #tpu.memory_space<vmem>>, vector<6x640xf32>
    %c0_3 = arith.constant 0 : index
    %c0_4 = arith.constant 0 : index
    %2 = vector.load %arg3[%c0_3, %c0_4] : memref<32x5xf32, #tpu.memory_space<vmem>>, vector<32x5xf32>
    %cst = arith.constant dense<0.000000e+00> : vector<32x640xf32>
    %3 = tpu.matmul %2, %0, %cst {dimension_numbers = #tpu.dot_dimension_numbers<[1], [0], [0], [1], [0, 0, 1, 1], [], []>} : vector<32x5xf32>, vector<5x640xf32>, vector<32x640xf32> -> vector<32x640xf32>
    %cst_5 = arith.constant 0.000000e+00 : f32
    %4 = vector.broadcast %cst_5 : f32 to vector<32x640xf32>
    %5 = arith.maximumf %3, %4 : vector<32x640xf32>
    %c0_6 = arith.constant 0 : index
    %c0_7 = arith.constant 0 : index
    %6 = vector.load %arg4[%c0_6, %c0_7] : memref<64x32xf32, #tpu.memory_space<vmem>>, vector<64x32xf32>
    %cst_8 = arith.constant dense<0.000000e+00> : vector<64x640xf32>
    %7 = tpu.matmul %6, %5, %cst_8 {dimension_numbers = #tpu.dot_dimension_numbers<[1], [0], [0], [1], [0, 0, 1, 1], [], []>} : vector<64x32xf32>, vector<32x640xf32>, vector<64x640xf32> -> vector<64x640xf32>
    %c0_9 = arith.constant 0 : index
    %c0_10 = arith.constant 0 : index
    %8 = vector.load %arg5[%c0_9, %c0_10] : memref<64x1xf32, #tpu.memory_space<vmem>>, vector<64x1xf32>
    %9 = vector.broadcast %8 : vector<64x1xf32> to vector<64x640xf32>
    %10 = arith.addf %7, %9 : vector<64x640xf32>
    %cst_11 = arith.constant 0.000000e+00 : f32
    %11 = vector.broadcast %cst_11 : f32 to vector<64x640xf32>
    %12 = arith.maximumf %10, %11 : vector<64x640xf32>
    %c0_12 = arith.constant 0 : index
    %c0_13 = arith.constant 0 : index
    %13 = vector.load %arg6[%c0_12, %c0_13] : memref<5x64xf32, #tpu.memory_space<vmem>>, vector<5x64xf32>
    %cst_14 = arith.constant dense<0.000000e+00> : vector<5x640xf32>
    %14 = tpu.matmul %13, %12, %cst_14 {dimension_numbers = #tpu.dot_dimension_numbers<[1], [0], [0], [1], [0, 0, 1, 1], [], []>} : vector<5x64xf32>, vector<64x640xf32>, vector<5x640xf32> -> vector<5x640xf32>
    %c0_15 = arith.constant 0 : index
    %c0_16 = arith.constant 0 : index
    %15 = vector.load %arg7[%c0_15, %c0_16] : memref<5x1xf32, #tpu.memory_space<vmem>>, vector<5x1xf32>
    %16 = vector.broadcast %15 : vector<5x1xf32> to vector<5x640xf32>
    %17 = arith.addf %14, %16 : vector<5x640xf32>
    %18 = math.tanh %17 : vector<5x640xf32>
    %19 = vector.extract_strided_slice %0 {offsets = [3, 0], sizes = [1, 640], strides = [1, 1]} : vector<5x640xf32> to vector<1x640xf32>
    %20 = tpu.reciprocal %19 : vector<1x640xf32> -> vector<1x640xf32>
    %21 = vector.extract_strided_slice %0 {offsets = [0, 0], sizes = [3, 640], strides = [1, 1]} : vector<5x640xf32> to vector<3x640xf32>
    %22 = vector.broadcast %20 : vector<1x640xf32> to vector<3x640xf32>
    %23 = arith.mulf %21, %22 : vector<3x640xf32>
    %24 = vector.extract_strided_slice %1 {offsets = [0, 0], sizes = [3, 640], strides = [1, 1]} : vector<6x640xf32> to vector<3x640xf32>
    %25 = vector.extract_strided_slice %1 {offsets = [3, 0], sizes = [3, 640], strides = [1, 1]} : vector<6x640xf32> to vector<3x640xf32>
    %26 = vector.extract_strided_slice %24 {offsets = [0, 0], sizes = [1, 640], strides = [1, 1]} : vector<3x640xf32> to vector<1x640xf32>
    %27 = vector.extract_strided_slice %24 {offsets = [1, 0], sizes = [1, 640], strides = [1, 1]} : vector<3x640xf32> to vector<1x640xf32>
    %28 = vector.extract_strided_slice %24 {offsets = [2, 0], sizes = [1, 640], strides = [1, 1]} : vector<3x640xf32> to vector<1x640xf32>
    %29 = vector.extract_strided_slice %25 {offsets = [0, 0], sizes = [1, 640], strides = [1, 1]} : vector<3x640xf32> to vector<1x640xf32>
    %30 = vector.extract_strided_slice %25 {offsets = [1, 0], sizes = [1, 640], strides = [1, 1]} : vector<3x640xf32> to vector<1x640xf32>
    %31 = vector.extract_strided_slice %25 {offsets = [2, 0], sizes = [1, 640], strides = [1, 1]} : vector<3x640xf32> to vector<1x640xf32>
    %32 = vector.extract_strided_slice %18 {offsets = [0, 0], sizes = [1, 640], strides = [1, 1]} : vector<5x640xf32> to vector<1x640xf32>
    %33 = vector.extract_strided_slice %18 {offsets = [1, 0], sizes = [1, 640], strides = [1, 1]} : vector<5x640xf32> to vector<1x640xf32>
    %34 = vector.extract_strided_slice %18 {offsets = [2, 0], sizes = [1, 640], strides = [1, 1]} : vector<5x640xf32> to vector<1x640xf32>
    %35 = vector.extract_strided_slice %18 {offsets = [3, 0], sizes = [1, 640], strides = [1, 1]} : vector<5x640xf32> to vector<1x640xf32>
    %36 = vector.extract_strided_slice %18 {offsets = [4, 0], sizes = [1, 640], strides = [1, 1]} : vector<5x640xf32> to vector<1x640xf32>
    %37 = arith.mulf %23, %24 : vector<3x640xf32>
    %38 = arith.mulf %23, %25 : vector<3x640xf32>
    %39 = vector.extract_strided_slice %37 {offsets = [0, 0], sizes = [1, 640], strides = [1, 1]} : vector<3x640xf32> to vector<1x640xf32>
    %40 = vector.extract_strided_slice %37 {offsets = [1, 0], sizes = [1, 640], strides = [1, 1]} : vector<3x640xf32> to vector<1x640xf32>
    %41 = arith.addf %39, %40 : vector<1x640xf32>
    %42 = vector.extract_strided_slice %37 {offsets = [2, 0], sizes = [1, 640], strides = [1, 1]} : vector<3x640xf32> to vector<1x640xf32>
    %43 = arith.addf %41, %42 : vector<1x640xf32>
    %44 = vector.extract_strided_slice %38 {offsets = [0, 0], sizes = [1, 640], strides = [1, 1]} : vector<3x640xf32> to vector<1x640xf32>
    %45 = vector.extract_strided_slice %38 {offsets = [1, 0], sizes = [1, 640], strides = [1, 1]} : vector<3x640xf32> to vector<1x640xf32>
    %46 = arith.addf %44, %45 : vector<1x640xf32>
    %47 = vector.extract_strided_slice %38 {offsets = [2, 0], sizes = [1, 640], strides = [1, 1]} : vector<3x640xf32> to vector<1x640xf32>
    %48 = arith.addf %46, %47 : vector<1x640xf32>
    %49 = arith.subf %32, %33 : vector<1x640xf32>
    %50 = arith.mulf %49, %43 : vector<1x640xf32>
    %51 = arith.subf %35, %36 : vector<1x640xf32>
    %52 = arith.mulf %51, %48 : vector<1x640xf32>
    %53 = vector.broadcast %33 : vector<1x640xf32> to vector<3x640xf32>
    %54 = arith.mulf %53, %24 : vector<3x640xf32>
    %55 = vector.broadcast %50 : vector<1x640xf32> to vector<3x640xf32>
    %56 = arith.mulf %55, %23 : vector<3x640xf32>
    %57 = arith.addf %54, %56 : vector<3x640xf32>
    %58 = vector.broadcast %36 : vector<1x640xf32> to vector<3x640xf32>
    %59 = arith.mulf %58, %25 : vector<3x640xf32>
    %60 = vector.broadcast %52 : vector<1x640xf32> to vector<3x640xf32>
    %61 = arith.mulf %60, %23 : vector<3x640xf32>
    %62 = arith.addf %59, %61 : vector<3x640xf32>
    %63 = vector.broadcast %34 : vector<1x640xf32> to vector<3x640xf32>
    %64 = arith.mulf %63, %23 : vector<3x640xf32>
    %65 = vector.extract_strided_slice %64 {offsets = [0, 0], sizes = [1, 640], strides = [1, 1]} : vector<3x640xf32> to vector<1x640xf32>
    %66 = vector.extract_strided_slice %64 {offsets = [1, 0], sizes = [1, 640], strides = [1, 1]} : vector<3x640xf32> to vector<1x640xf32>
    %67 = vector.extract_strided_slice %64 {offsets = [2, 0], sizes = [1, 640], strides = [1, 1]} : vector<3x640xf32> to vector<1x640xf32>
    %68 = vector.extract_strided_slice %57 {offsets = [0, 0], sizes = [1, 640], strides = [1, 1]} : vector<3x640xf32> to vector<1x640xf32>
    %69 = arith.mulf %66, %31 : vector<1x640xf32>
    %70 = arith.mulf %67, %30 : vector<1x640xf32>
    %71 = arith.subf %69, %70 : vector<1x640xf32>
    %72 = arith.addf %68, %71 : vector<1x640xf32>
    %c0_17 = arith.constant 0 : index
    %c0_18 = arith.constant 0 : index
    %73 = vector.load %arg8[%c0_17, %c0_18] : memref<6x640xf32, #tpu.memory_space<vmem>>, vector<1x640xf32>
    tpu.vector_store %arg8[%c0_17, %c0_18], %72 {strides = array<i32>} : memref<6x640xf32, #tpu.memory_space<vmem>>, vector<1x640xf32>,
    %74 = vector.extract_strided_slice %57 {offsets = [1, 0], sizes = [1, 640], strides = [1, 1]} : vector<3x640xf32> to vector<1x640xf32>
    %75 = arith.mulf %67, %29 : vector<1x640xf32>
    %76 = arith.mulf %65, %31 : vector<1x640xf32>
    %77 = arith.subf %75, %76 : vector<1x640xf32>
    %78 = arith.addf %74, %77 : vector<1x640xf32>
    %c1 = arith.constant 1 : index
    %c0_19 = arith.constant 0 : index
    %79 = vector.load %arg8[%c1, %c0_19] : memref<6x640xf32, #tpu.memory_space<vmem>>, vector<1x640xf32>
    tpu.vector_store %arg8[%c1, %c0_19], %78 {strides = array<i32>} : memref<6x640xf32, #tpu.memory_space<vmem>>, vector<1x640xf32>,
    %80 = vector.extract_strided_slice %57 {offsets = [2, 0], sizes = [1, 640], strides = [1, 1]} : vector<3x640xf32> to vector<1x640xf32>
    %81 = arith.mulf %65, %30 : vector<1x640xf32>
    %82 = arith.mulf %66, %29 : vector<1x640xf32>
    %83 = arith.subf %81, %82 : vector<1x640xf32>
    %84 = arith.addf %80, %83 : vector<1x640xf32>
    %c2 = arith.constant 2 : index
    %c0_20 = arith.constant 0 : index
    %85 = vector.load %arg8[%c2, %c0_20] : memref<6x640xf32, #tpu.memory_space<vmem>>, vector<1x640xf32>
    tpu.vector_store %arg8[%c2, %c0_20], %84 {strides = array<i32>} : memref<6x640xf32, #tpu.memory_space<vmem>>, vector<1x640xf32>,
    %86 = vector.extract_strided_slice %62 {offsets = [0, 0], sizes = [1, 640], strides = [1, 1]} : vector<3x640xf32> to vector<1x640xf32>
    %87 = arith.mulf %27, %67 : vector<1x640xf32>
    %88 = arith.mulf %28, %66 : vector<1x640xf32>
    %89 = arith.subf %87, %88 : vector<1x640xf32>
    %90 = arith.addf %86, %89 : vector<1x640xf32>
    %c3 = arith.constant 3 : index
    %c0_21 = arith.constant 0 : index
    %91 = vector.load %arg8[%c3, %c0_21] : memref<6x640xf32, #tpu.memory_space<vmem>>, vector<1x640xf32>
    tpu.vector_store %arg8[%c3, %c0_21], %90 {strides = array<i32>} : memref<6x640xf32, #tpu.memory_space<vmem>>, vector<1x640xf32>,
    %92 = vector.extract_strided_slice %62 {offsets = [1, 0], sizes = [1, 640], strides = [1, 1]} : vector<3x640xf32> to vector<1x640xf32>
    %93 = arith.mulf %28, %65 : vector<1x640xf32>
    %94 = arith.mulf %26, %67 : vector<1x640xf32>
    %95 = arith.subf %93, %94 : vector<1x640xf32>
    %96 = arith.addf %92, %95 : vector<1x640xf32>
    %c4 = arith.constant 4 : index
    %c0_22 = arith.constant 0 : index
    %97 = vector.load %arg8[%c4, %c0_22] : memref<6x640xf32, #tpu.memory_space<vmem>>, vector<1x640xf32>
    tpu.vector_store %arg8[%c4, %c0_22], %96 {strides = array<i32>} : memref<6x640xf32, #tpu.memory_space<vmem>>, vector<1x640xf32>,
    %98 = vector.extract_strided_slice %62 {offsets = [2, 0], sizes = [1, 640], strides = [1, 1]} : vector<3x640xf32> to vector<1x640xf32>
    %99 = arith.mulf %26, %66 : vector<1x640xf32>
    %100 = arith.mulf %27, %65 : vector<1x640xf32>
    %101 = arith.subf %99, %100 : vector<1x640xf32>
    %102 = arith.addf %98, %101 : vector<1x640xf32>
    %c5 = arith.constant 5 : index
    %c0_23 = arith.constant 0 : index
    %103 = vector.load %arg8[%c5, %c0_23] : memref<6x640xf32, #tpu.memory_space<vmem>>, vector<1x640xf32>
    tpu.vector_store %arg8[%c5, %c0_23], %102 {strides = array<i32>} : memref<6x640xf32, #tpu.memory_space<vmem>>, vector<1x640xf32>,
    return
  }
  func.func @transform_0(%arg0: i32) -> (i32, i32) {
    %c0_i32 = arith.constant 0 : i32
    %c0_i32_0 = arith.constant 0 : i32
    return %c0_i32, %arg0 : i32, i32
  }
  func.func @transform_1(%arg0: i32) -> (i32, i32) {
    %c0_i32 = arith.constant 0 : i32
    %c0_i32_0 = arith.constant 0 : i32
    return %c0_i32, %arg0 : i32, i32
  }
  func.func @transform_2(%arg0: i32) -> (i32, i32) {
    %c0_i32 = arith.constant 0 : i32
    %c0_i32_0 = arith.constant 0 : i32
    %c0_i32_1 = arith.constant 0 : i32
    return %c0_i32, %c0_i32_0 : i32, i32
  }
  func.func @transform_3(%arg0: i32) -> (i32, i32) {
    %c0_i32 = arith.constant 0 : i32
    %c0_i32_0 = arith.constant 0 : i32
    %c0_i32_1 = arith.constant 0 : i32
    return %c0_i32, %c0_i32_0 : i32, i32
  }
  func.func @transform_4(%arg0: i32) -> (i32, i32) {
    %c0_i32 = arith.constant 0 : i32
    %c0_i32_0 = arith.constant 0 : i32
    %c0_i32_1 = arith.constant 0 : i32
    return %c0_i32, %c0_i32_0 : i32, i32
  }
  func.func @transform_5(%arg0: i32) -> (i32, i32) {
    %c0_i32 = arith.constant 0 : i32
    %c0_i32_0 = arith.constant 0 : i32
    %c0_i32_1 = arith.constant 0 : i32
    return %c0_i32, %c0_i32_0 : i32, i32
  }
  func.func @transform_6(%arg0: i32) -> (i32, i32) {
    %c0_i32 = arith.constant 0 : i32
    %c0_i32_0 = arith.constant 0 : i32
    %c0_i32_1 = arith.constant 0 : i32
    return %c0_i32, %c0_i32_0 : i32, i32
  }
  func.func @transform_7(%arg0: i32) -> (i32, i32) {
    %c0_i32 = arith.constant 0 : i32
    %c0_i32_0 = arith.constant 0 : i32
    return %c0_i32, %arg0 : i32, i32
  }
}

</mosaic_0001>

<llo_original>
// kernel: tpu_custom_call.1
$region0: #{tpu_custom_call.1}
  #allocation0 [shape = 'u32[]', space=smem, size = 0x4, offset = 0x4, fixed_abs, tag = 'smem constant byte address 0x4 - core index']
  #allocation1 [shape = 'u32[144,128]{1,0:T(1,128)}', space=vmem, size = 0x12000, scoped, tag = 'internal scratch']
  %s0 = inlined_call_operand.vmem [shape: f32[5,640], index: 0, kind: input, shape index: {}]
  %s1 = inlined_call_operand.vmem [shape: f32[6,640], index: 1, kind: input, shape index: {}]
  %s2 = inlined_call_operand.vmem [shape: f32[32,5], index: 2, kind: input, shape index: {}]
  %s3 = inlined_call_operand.vmem [shape: f32[64,32], index: 3, kind: input, shape index: {}]
  %s4 = inlined_call_operand.vmem [shape: f32[64,1], index: 4, kind: input, shape index: {}]
  %s5 = inlined_call_operand.vmem [shape: f32[5,64], index: 5, kind: input, shape index: {}]
  %s6 = inlined_call_operand.vmem [shape: f32[5,1], index: 6, kind: input, shape index: {}]
  %s7 = inlined_call_operand.hbm [shape: f32[6,640], index: 7, kind: output, shape index: {}]
  %s8 = sld [smem:[#allocation0]]
  $region38: #{tpu_custom_call.1} parent=0
    _
  %s10 = ssub.s32 1, %s8
  %s11 = scalar_select 0, %s10, %s8
  $region1: #{tpu_custom_call.1} parent=0
    #allocation2 [shape = 'u8[20480]{0}', space=vmem, size = 0x5000, scoped, tag = 'output window, operand 0, single buffered']
    #allocation3 [shape = 's32[1]{0}', space=sflag, size = 0x4, scoped, tag = 'scoped memory for tpu_custom_call.1']
    %12 = vsyncpa [#allocation3], 0
    // Predicated region
    $region2: #{tpu_custom_call.1} parent=1 // pred_check
      _
    $region3: #{tpu_custom_call.1} parent=1 // pred_check_branch
      %14 = sbr.rel (0) target = $region5
    $region4: #{tpu_custom_call.1} parent=1 // pred_region
      _
    $region5: #{tpu_custom_call.1} parent=1 // pred_fallthru
      _
    // Predicated region
    $region6: #{tpu_custom_call.1} parent=1 // pred_check
      _
    $region7: #{tpu_custom_call.1} parent=1 // pred_check_branch
      %16 = sbr.rel (0) target = $region9
    $region8: #{tpu_custom_call.1} parent=1 // pred_region
      _
    $region9: #{tpu_custom_call.1} parent=1 // pred_fallthru
      _
    // Predicated region
    $region10: #{tpu_custom_call.1} parent=1 // pred_check
      _
    $region11: #{tpu_custom_call.1} parent=1 // pred_check_branch
      %18 = sbr.rel (0) target = $region13
    $region12: #{tpu_custom_call.1} parent=1 // pred_region
      _
    $region13: #{tpu_custom_call.1} parent=1 // pred_fallthru
      _
    // Predicated region
    $region14: #{tpu_custom_call.1} parent=1 // pred_check
      _
    $region15: #{tpu_custom_call.1} parent=1 // pred_check_branch
      %20 = sbr.rel (0) target = $region17
    $region16: #{tpu_custom_call.1} parent=1 // pred_region
      _
    $region17: #{tpu_custom_call.1} parent=1 // pred_fallthru
      _
    // Predicated region
    $region18: #{tpu_custom_call.1} parent=1 // pred_check
      _
    $region19: #{tpu_custom_call.1} parent=1 // pred_check_branch
      %22 = sbr.rel (0) target = $region21
    $region20: #{tpu_custom_call.1} parent=1 // pred_region
      _
    $region21: #{tpu_custom_call.1} parent=1 // pred_fallthru
      _
    // Predicated region
    $region22: #{tpu_custom_call.1} parent=1 // pred_check
      _
    $region23: #{tpu_custom_call.1} parent=1 // pred_check_branch
      %24 = sbr.rel (0) target = $region25
    $region24: #{tpu_custom_call.1} parent=1 // pred_region
      _
    $region25: #{tpu_custom_call.1} parent=1 // pred_fallthru
      _
    // Predicated region
    $region26: #{tpu_custom_call.1} parent=1 // pred_check
      _
    $region27: #{tpu_custom_call.1} parent=1 // pred_check_branch
      %26 = sbr.rel (0) target = $region29
    $region28: #{tpu_custom_call.1} parent=1 // pred_region
      _
    $region29: #{tpu_custom_call.1} parent=1 // pred_fallthru
      _
    %v27 = vld [vmem:[%s0] sm:$0x1f]
    %v28 = vld [vmem:[%s0 + $0x8] sm:$0x1f]
    %v29 = vld [vmem:[%s0 + $0x10] sm:$0x1f]
    %v30 = vld [vmem:[%s0 + $0x18] sm:$0x1f]
    %v31 = vld [vmem:[%s0 + $0x20] sm:$0x1f]
    %v32 = vld [vmem:[%s1] sm:$0x3f]
    %v33 = vld [vmem:[%s1 + $0x8] sm:$0x3f]
    %v34 = vld [vmem:[%s1 + $0x10] sm:$0x3f]
    %v35 = vld [vmem:[%s1 + $0x18] sm:$0x3f]
    %v36 = vld [vmem:[%s1 + $0x20] sm:$0x3f]
    %v37 = vld [vmem:[%s2] sm:$0xff]
    %v38 = vld [vmem:[%s2 + $0x8] sm:$0xff]
    %v39 = vld [vmem:[%s2 + $0x10] sm:$0xff]
    %v40 = vld [vmem:[%s2 + $0x18] sm:$0xff]
    %vm41 = vcmask 39936
    %v43 = vsel %vm41, %v37, 0
    %v46 = vsel %vm41, %v38, 0
    %v49 = vsel %vm41, %v39, 0
    %v52 = vsel %vm41, %v40, 0
    %vm54 = vcmask 1044480
    %v56 = vsel %vm54, %v27, 0
    %v59 = vsel %vm54, %v28, 0
    %v62 = vsel %vm54, %v29, 0
    %v65 = vsel %vm54, %v30, 0
    %v68 = vsel %vm54, %v31, 0
    %70 = vmatprep.subr.mxu0 0.0
    %71 = vmatpush1.msra.mxu0 0.0
    %72 = vmatprep.subr.mxu0 0.0
    %73 = vmatpush1.msra.mxu0 0.0
    %74 = vmatprep.subr.mxu0 0.0
    %75 = vmatpush1.msra.mxu0 0.0
    %76 = vmatprep.subr.mxu0 0.0
    %77 = vmatpush1.msra.mxu0 0.0
    %78 = vmatprep.subr.mxu0 0.0
    %79 = vmatpush1.msra.mxu0 0.0
    %80 = vmatprep.subr.mxu0 0.0
    %81 = vmatpush1.msra.mxu0 0.0
    %82 = vmatprep.subr.mxu0 0.0
    %83 = vmatpush1.msra.mxu0 0.0
    %84 = vmatprep.subr.mxu0 0.0
    %85 = vmatpush1.msra.mxu0 0.0
    %86 = vmatprep.subr.mxu0 0.0
    %87 = vmatpush1.msra.mxu0 0.0
    %88 = vmatprep.subr.mxu0 0.0
    %89 = vmatpush1.msra.mxu0 0.0
    %90 = vmatprep.subr.mxu0 0.0
    %91 = vmatpush1.msra.mxu0 0.0
    %92 = vmatprep.subr.mxu0 0.0
    %93 = vmatpush1.msra.mxu0 0.0
    %94 = vmatprep.subr.mxu0 0.0
    %95 = vmatpush1.msra.mxu0 0.0
    %96 = vmatprep.subr.mxu0 0.0
    %97 = vmatpush1.msra.mxu0 0.0
    %98 = vmatprep.subr.mxu0 0.0
    %99 = vmatpush1.msra.mxu0 0.0
    %100 = vmatprep.subr.mxu0 %v59
    %101 = vmatpush1.msra.mxu0 %v56
    %102 = vmatprep.subr.mxu0 0.0
    %103 = vmatpush2.msra.mxu0 0.0
    %104 = vmatprep.subr.mxu0 0.0
    %105 = vmatpush2.msra.mxu0 0.0
    %106 = vmatprep.subr.mxu0 0.0
    %107 = vmatpush2.msra.mxu0 0.0
    %108 = vmatprep.subr.mxu0 0.0
    %109 = vmatpush2.msra.mxu0 0.0
    %110 = vmatprep.subr.mxu0 0.0
    %111 = vmatpush2.msra.mxu0 0.0
    %112 = vmatprep.subr.mxu0 0.0
    %113 = vmatpush2.msra.mxu0 0.0
    %114 = vmatprep.subr.mxu0 0.0
    %115 = vmatpush2.msra.mxu0 0.0
    %116 = vmatprep.subr.mxu0 0.0
    %117 = vmatpush2.msra.mxu0 0.0
    %118 = vmatprep.subr.mxu0 0.0
    %119 = vmatpush2.msra.mxu0 0.0
    %120 = vmatprep.subr.mxu0 0.0
    %121 = vmatpush2.msra.mxu0 0.0
    %122 = vmatprep.subr.mxu0 0.0
    %123 = vmatpush2.msra.mxu0 0.0
    %124 = vmatprep.subr.mxu0 0.0
    %125 = vmatpush2.msra.mxu0 0.0
    %126 = vmatprep.subr.mxu0 0.0
    %127 = vmatpush2.msra.mxu0 0.0
    %128 = vmatprep.subr.mxu0 0.0
    %129 = vmatpush2.msra.mxu0 0.0
    %130 = vmatprep.subr.mxu0 0.0
    %131 = vmatpush2.msra.mxu0 0.0
    %132 = vmatprep.subr.mxu0 0.0
    %133 = vmatpush2.msra.mxu0 0.0
    %134 = vmatprep.mubr.f32.mxu0 0.0
    %135 = vmatmul.mubr.f32.gmra.mxu0 %v43
    %v136 = vpop.f32.mrf.mxu0
    %v137 = vadd.f32 0.0, %v136
    %v138 = vpop.f32.mrf.mxu0
    %v139 = vadd.f32 0.0, %v138
    %140 = vmatprep.mubr.f32.mxu0 0.0
    %141 = vmatmul.mubr.f32.gmra.mxu0 %v46
    %v142 = vpop.f32.mrf.mxu0
    %v143 = vadd.f32 0.0, %v142
    %v144 = vpop.f32.mrf.mxu0
    %v145 = vadd.f32 0.0, %v144
    %146 = vmatprep.mubr.f32.mxu0 0.0
    %147 = vmatmul.mubr.f32.gmra.mxu0 %v49
    %v148 = vpop.f32.mrf.mxu0
    %v149 = vadd.f32 0.0, %v148
    %v150 = vpop.f32.mrf.mxu0
    %v151 = vadd.f32 0.0, %v150
    %152 = vmatprep.mubr.f32.mxu0 0.0
    %153 = vmatmul.mubr.f32.gmra.mxu0 %v52
    %v154 = vpop.f32.mrf.mxu0
    %v155 = vadd.f32 0.0, %v154
    %v156 = vpop.f32.mrf.mxu0
    %v157 = vadd.f32 0.0, %v156
    %158 = vdwg.mxu0
    %159 = vmatprep.subr.mxu0 0.0
    %160 = vmatpush1.msra.mxu0 0.0
    %161 = vmatprep.subr.mxu0 0.0
    %162 = vmatpush1.msra.mxu0 0.0
    %163 = vmatprep.subr.mxu0 0.0
    %164 = vmatpush1.msra.mxu0 0.0
    %165 = vmatprep.subr.mxu0 0.0
    %166 = vmatpush1.msra.mxu0 0.0
    %167 = vmatprep.subr.mxu0 0.0
    %168 = vmatpush1.msra.mxu0 0.0
    %169 = vmatprep.subr.mxu0 0.0
    %170 = vmatpush1.msra.mxu0 0.0
    %171 = vmatprep.subr.mxu0 0.0
    %172 = vmatpush1.msra.mxu0 0.0
    %173 = vmatprep.subr.mxu0 0.0
    %174 = vmatpush1.msra.mxu0 0.0
    %175 = vmatprep.subr.mxu0 0.0
    %176 = vmatpush1.msra.mxu0 0.0
    %177 = vmatprep.subr.mxu0 0.0
    %178 = vmatpush1.msra.mxu0 0.0
    %179 = vmatprep.subr.mxu0 0.0
    %180 = vmatpush1.msra.mxu0 0.0
    %181 = vmatprep.subr.mxu0 0.0
    %182 = vmatpush1.msra.mxu0 0.0
    %183 = vmatprep.subr.mxu0 0.0
    %184 = vmatpush1.msra.mxu0 0.0
    %185 = vmatprep.subr.mxu0 0.0
    %186 = vmatpush1.msra.mxu0 0.0
    %187 = vmatprep.subr.mxu0 0.0
    %188 = vmatpush1.msra.mxu0 0.0
    %189 = vmatprep.subr.mxu0 %v65
    %190 = vmatpush1.msra.mxu0 %v62
    %191 = vmatprep.subr.mxu0 0.0
    %192 = vmatpush2.msra.mxu0 0.0
    %193 = vmatprep.subr.mxu0 0.0
    %194 = vmatpush2.msra.mxu0 0.0
    %195 = vmatprep.subr.mxu0 0.0
    %196 = vmatpush2.msra.mxu0 0.0
    %197 = vmatprep.subr.mxu0 0.0
    %198 = vmatpush2.msra.mxu0 0.0
    %199 = vmatprep.subr.mxu0 0.0
    %200 = vmatpush2.msra.mxu0 0.0
    %201 = vmatprep.subr.mxu0 0.0
    %202 = vmatpush2.msra.mxu0 0.0
    %203 = vmatprep.subr.mxu0 0.0
    %204 = vmatpush2.msra.mxu0 0.0
    %205 = vmatprep.subr.mxu0 0.0
    %206 = vmatpush2.msra.mxu0 0.0
    %207 = vmatprep.subr.mxu0 0.0
    %208 = vmatpush2.msra.mxu0 0.0
    %209 = vmatprep.subr.mxu0 0.0
    %210 = vmatpush2.msra.mxu0 0.0
    %211 = vmatprep.subr.mxu0 0.0
    %212 = vmatpush2.msra.mxu0 0.0
    %213 = vmatprep.subr.mxu0 0.0
    %214 = vmatpush2.msra.mxu0 0.0
    %215 = vmatprep.subr.mxu0 0.0
    %216 = vmatpush2.msra.mxu0 0.0
    %217 = vmatprep.subr.mxu0 0.0
    %218 = vmatpush2.msra.mxu0 0.0
    %219 = vmatprep.subr.mxu0 0.0
    %220 = vmatpush2.msra.mxu0 0.0
    %221 = vmatprep.subr.mxu0 0.0
    %222 = vmatpush2.msra.mxu0 0.0
    %223 = vmatprep.mubr.f32.mxu0 0.0
    %224 = vmatmul.mubr.f32.gmra.mxu0 %v43
    %v225 = vpop.f32.mrf.mxu0
    %v226 = vadd.f32 0.0, %v225
    %v227 = vpop.f32.mrf.mxu0
    %v228 = vadd.f32 0.0, %v227
    %229 = vmatprep.mubr.f32.mxu0 0.0
    %230 = vmatmul.mubr.f32.gmra.mxu0 %v46
    %v231 = vpop.f32.mrf.mxu0
    %v232 = vadd.f32 0.0, %v231
    %v233 = vpop.f32.mrf.mxu0
    %v234 = vadd.f32 0.0, %v233
    %235 = vmatprep.mubr.f32.mxu0 0.0
    %236 = vmatmul.mubr.f32.gmra.mxu0 %v49
    %v237 = vpop.f32.mrf.mxu0
    %v238 = vadd.f32 0.0, %v237
    %v239 = vpop.f32.mrf.mxu0
    %v240 = vadd.f32 0.0, %v239
    %241 = vmatprep.mubr.f32.mxu0 0.0
    %242 = vmatmul.mubr.f32.gmra.mxu0 %v52
    %v243 = vpop.f32.mrf.mxu0
    %v244 = vadd.f32 0.0, %v243
    %v245 = vpop.f32.mrf.mxu0
    %v246 = vadd.f32 0.0, %v245
    %247 = vdwg.mxu0
    %248 = vmatprep.subr.mxu0 0.0
    %249 = vmatpush1.msra.mxu0 0.0
    %250 = vmatprep.subr.mxu0 0.0
    %251 = vmatpush1.msra.mxu0 0.0
    %252 = vmatprep.subr.mxu0 0.0
    %253 = vmatpush1.msra.mxu0 0.0
    %254 = vmatprep.subr.mxu0 0.0
    %255 = vmatpush1.msra.mxu0 0.0
    %256 = vmatprep.subr.mxu0 0.0
    %257 = vmatpush1.msra.mxu0 0.0
    %258 = vmatprep.subr.mxu0 0.0
    %259 = vmatpush1.msra.mxu0 0.0
    %260 = vmatprep.subr.mxu0 0.0
    %261 = vmatpush1.msra.mxu0 0.0
    %262 = vmatprep.subr.mxu0 0.0
    %263 = vmatpush1.msra.mxu0 0.0
    %264 = vmatprep.subr.mxu0 0.0
    %265 = vmatpush1.msra.mxu0 0.0
    %266 = vmatprep.subr.mxu0 0.0
    %267 = vmatpush1.msra.mxu0 0.0
    %268 = vmatprep.subr.mxu0 0.0
    %269 = vmatpush1.msra.mxu0 0.0
    %270 = vmatprep.subr.mxu0 0.0
    %271 = vmatpush1.msra.mxu0 0.0
    %272 = vmatprep.subr.mxu0 0.0
    %273 = vmatpush1.msra.mxu0 0.0
    %274 = vmatprep.subr.mxu0 0.0
    %275 = vmatpush1.msra.mxu0 0.0
    %276 = vmatprep.subr.mxu0 0.0
    %277 = vmatpush1.msra.mxu0 0.0
    %278 = vmatprep.subr.mxu0 0.0
    %279 = vmatpush1.msra.mxu0 %v68
    %280 = vmatprep.subr.mxu0 0.0
    %281 = vmatpush2.msra.mxu0 0.0
    %282 = vmatprep.subr.mxu0 0.0
    %283 = vmatpush2.msra.mxu0 0.0
    %284 = vmatprep.subr.mxu0 0.0
    %285 = vmatpush2.msra.mxu0 0.0
    %286 = vmatprep.subr.mxu0 0.0
    %287 = vmatpush2.msra.mxu0 0.0
    %288 = vmatprep.subr.mxu0 0.0
    %289 = vmatpush2.msra.mxu0 0.0
    %290 = vmatprep.subr.mxu0 0.0
    %291 = vmatpush2.msra.mxu0 0.0
    %292 = vmatprep.subr.mxu0 0.0
    %293 = vmatpush2.msra.mxu0 0.0
    %294 = vmatprep.subr.mxu0 0.0
    %295 = vmatpush2.msra.mxu0 0.0
    %296 = vmatprep.subr.mxu0 0.0
    %297 = vmatpush2.msra.mxu0 0.0
    %298 = vmatprep.subr.mxu0 0.0
    %299 = vmatpush2.msra.mxu0 0.0
    %300 = vmatprep.subr.mxu0 0.0
    %301 = vmatpush2.msra.mxu0 0.0
    %302 = vmatprep.subr.mxu0 0.0
    %303 = vmatpush2.msra.mxu0 0.0
    %304 = vmatprep.subr.mxu0 0.0
    %305 = vmatpush2.msra.mxu0 0.0
    %306 = vmatprep.subr.mxu0 0.0
    %307 = vmatpush2.msra.mxu0 0.0
    %308 = vmatprep.subr.mxu0 0.0
    %309 = vmatpush2.msra.mxu0 0.0
    %310 = vmatprep.subr.mxu0 0.0
    %311 = vmatpush2.msra.mxu0 0.0
    %312 = vmatprep.mubr.f32.mxu0 0.0
    %313 = vmatmul.mubr.f32.gmra.mxu0 %v43
    %v314 = vpop.f32.mrf.mxu0
    %v315 = vadd.f32 0.0, %v314
    %v316 = vpop.f32.mrf.mxu0
    %317 = vmatprep.mubr.f32.mxu0 0.0
    %318 = vmatmul.mubr.f32.gmra.mxu0 %v46
    %v319 = vpop.f32.mrf.mxu0
    %v320 = vadd.f32 0.0, %v319
    %v321 = vpop.f32.mrf.mxu0
    %322 = vmatprep.mubr.f32.mxu0 0.0
    %323 = vmatmul.mubr.f32.gmra.mxu0 %v49
    %v324 = vpop.f32.mrf.mxu0
    %v325 = vadd.f32 0.0, %v324
    %v326 = vpop.f32.mrf.mxu0
    %327 = vmatprep.mubr.f32.mxu0 0.0
    %328 = vmatmul.mubr.f32.gmra.mxu0 %v52
    %v329 = vpop.f32.mrf.mxu0
    %v330 = vadd.f32 0.0, %v329
    %v331 = vpop.f32.mrf.mxu0
    %332 = vdwg.mxu0
    %v333 = vmax.f32 %v137, 0.0
    %v334 = vmax.f32 %v139, 0.0
    %v335 = vmax.f32 %v226, 0.0
    %v336 = vmax.f32 %v228, 0.0
    %v337 = vmax.f32 %v315, 0.0
    %v338 = vmax.f32 %v143, 0.0
    %v339 = vmax.f32 %v145, 0.0
    %v340 = vmax.f32 %v232, 0.0
    %v341 = vmax.f32 %v234, 0.0
    %v342 = vmax.f32 %v320, 0.0
    %v343 = vmax.f32 %v149, 0.0
    %v344 = vmax.f32 %v151, 0.0
    %v345 = vmax.f32 %v238, 0.0
    %v346 = vmax.f32 %v240, 0.0
    %v347 = vmax.f32 %v325, 0.0
    %v348 = vmax.f32 %v155, 0.0
    %v349 = vmax.f32 %v157, 0.0
    %v350 = vmax.f32 %v244, 0.0
    %v351 = vmax.f32 %v246, 0.0
    %v352 = vmax.f32 %v330, 0.0
    %v353 = vld [vmem:[%s3] sm:$0xff]
    %v354 = vld [vmem:[%s3 + $0x8] sm:$0xff]
    %v355 = vld [vmem:[%s3 + $0x10] sm:$0xff]
    %v356 = vld [vmem:[%s3 + $0x18] sm:$0xff]
    %v357 = vld [vmem:[%s3 + $0x20] sm:$0xff]
    %v358 = vld [vmem:[%s3 + $0x28] sm:$0xff]
    %v359 = vld [vmem:[%s3 + $0x30] sm:$0xff]
    %v360 = vld [vmem:[%s3 + $0x38] sm:$0xff]
    %v361 = vld [vmem:[%s4] sm:$0xff]
    %v362 = vld [vmem:[%s4 + $0x8] sm:$0xff]
    %v363 = vld [vmem:[%s4 + $0x10] sm:$0xff]
    %v364 = vld [vmem:[%s4 + $0x18] sm:$0xff]
    %v365 = vld [vmem:[%s4 + $0x20] sm:$0xff]
    %v366 = vld [vmem:[%s4 + $0x28] sm:$0xff]
    %v367 = vld [vmem:[%s4 + $0x30] sm:$0xff]
    %v368 = vld [vmem:[%s4 + $0x38] sm:$0xff]
    %370 = vset.pattern.permute.xlu0 0
    %371 = vperm.xlu0 %370, %v361
    %v372 = vpop.permute.xlu0 %371
    %375 = vset.pattern.permute.xlu0 0
    %376 = vperm.xlu0 %375, %v362
    %v377 = vpop.permute.xlu0 %376
    %380 = vset.pattern.permute.xlu0 0
    %381 = vperm.xlu0 %380, %v363
    %v382 = vpop.permute.xlu0 %381
    %385 = vset.pattern.permute.xlu0 0
    %386 = vperm.xlu0 %385, %v364
    %v387 = vpop.permute.xlu0 %386
    %390 = vset.pattern.permute.xlu0 0
    %391 = vperm.xlu0 %390, %v365
    %v392 = vpop.permute.xlu0 %391
    %395 = vset.pattern.permute.xlu0 0
    %396 = vperm.xlu0 %395, %v366
    %v397 = vpop.permute.xlu0 %396
    %400 = vset.pattern.permute.xlu0 0
    %401 = vperm.xlu0 %400, %v367
    %v402 = vpop.permute.xlu0 %401
    %405 = vset.pattern.permute.xlu0 0
    %406 = vperm.xlu0 %405, %v368
    %v407 = vpop.permute.xlu0 %406
    %vm409 = vcmask 261120
    %v411 = vsel %vm409, %v353, 0
    %v414 = vsel %vm409, %v354, 0
    %v417 = vsel %vm409, %v355, 0
    %v420 = vsel %vm409, %v356, 0
    %v423 = vsel %vm409, %v357, 0
    %v426 = vsel %vm409, %v358, 0
    %v429 = vsel %vm409, %v359, 0
    %v432 = vsel %vm409, %v360, 0
    %434 = vmatprep.subr.mxu0 0.0
    %435 = vmatpush1.msra.mxu0 0.0
    %436 = vmatprep.subr.mxu0 0.0
    %437 = vmatpush1.msra.mxu0 0.0
    %438 = vmatprep.subr.mxu0 0.0
    %439 = vmatpush1.msra.mxu0 0.0
    %440 = vmatprep.subr.mxu0 0.0
    %441 = vmatpush1.msra.mxu0 0.0
    %442 = vmatprep.subr.mxu0 0.0
    %443 = vmatpush1.msra.mxu0 0.0
    %444 = vmatprep.subr.mxu0 0.0
    %445 = vmatpush1.msra.mxu0 0.0
    %446 = vmatprep.subr.mxu0 0.0
    %447 = vmatpush1.msra.mxu0 0.0
    %448 = vmatprep.subr.mxu0 0.0
    %449 = vmatpush1.msra.mxu0 0.0
    %450 = vmatprep.subr.mxu0 0.0
    %451 = vmatpush1.msra.mxu0 0.0
    %452 = vmatprep.subr.mxu0 0.0
    %453 = vmatpush1.msra.mxu0 0.0
    %454 = vmatprep.subr.mxu0 0.0
    %455 = vmatpush1.msra.mxu0 0.0
    %456 = vmatprep.subr.mxu0 0.0
    %457 = vmatpush1.msra.mxu0 0.0
    %458 = vmatprep.subr.mxu0 %v349
    %459 = vmatpush1.msra.mxu0 %v348
    %460 = vmatprep.subr.mxu0 %v344
    %461 = vmatpush1.msra.mxu0 %v343
    %462 = vmatprep.subr.mxu0 %v339
    %463 = vmatpush1.msra.mxu0 %v338
    %464 = vmatprep.subr.mxu0 %v334
    %465 = vmatpush1.msra.mxu0 %v333
    %466 = vmatprep.subr.mxu0 0.0
    %467 = vmatpush2.msra.mxu0 0.0
    %468 = vmatprep.subr.mxu0 0.0
    %469 = vmatpush2.msra.mxu0 0.0
    %470 = vmatprep.subr.mxu0 0.0
    %471 = vmatpush2.msra.mxu0 0.0
    %472 = vmatprep.subr.mxu0 0.0
    %473 = vmatpush2.msra.mxu0 0.0
    %474 = vmatprep.subr.mxu0 0.0
    %475 = vmatpush2.msra.mxu0 0.0
    %476 = vmatprep.subr.mxu0 0.0
    %477 = vmatpush2.msra.mxu0 0.0
    %478 = vmatprep.subr.mxu0 0.0
    %479 = vmatpush2.msra.mxu0 0.0
    %480 = vmatprep.subr.mxu0 0.0
    %481 = vmatpush2.msra.mxu0 0.0
    %482 = vmatprep.subr.mxu0 0.0
    %483 = vmatpush2.msra.mxu0 0.0
    %484 = vmatprep.subr.mxu0 0.0
    %485 = vmatpush2.msra.mxu0 0.0
    %486 = vmatprep.subr.mxu0 0.0
    %487 = vmatpush2.msra.mxu0 0.0
    %488 = vmatprep.subr.mxu0 0.0
    %489 = vmatpush2.msra.mxu0 0.0
    %490 = vmatprep.subr.mxu0 0.0
    %491 = vmatpush2.msra.mxu0 0.0
    %492 = vmatprep.subr.mxu0 0.0
    %493 = vmatpush2.msra.mxu0 0.0
    %494 = vmatprep.subr.mxu0 0.0
    %495 = vmatpush2.msra.mxu0 0.0
    %496 = vmatprep.subr.mxu0 0.0
    %497 = vmatpush2.msra.mxu0 0.0
    %498 = vmatprep.mubr.f32.mxu0 0.0
    %499 = vmatmul.mubr.f32.gmra.mxu0 %v411
    %v500 = vpop.f32.mrf.mxu0
    %v501 = vadd.f32 %v372, %v500
    %v502 = vpop.f32.mrf.mxu0
    %v503 = vadd.f32 %v372, %v502
    %504 = vmatprep.mubr.f32.mxu0 0.0
    %505 = vmatmul.mubr.f32.gmra.mxu0 %v414
    %v506 = vpop.f32.mrf.mxu0
    %v507 = vadd.f32 %v377, %v506
    %v508 = vpop.f32.mrf.mxu0
    %v509 = vadd.f32 %v377, %v508
    %510 = vmatprep.mubr.f32.mxu0 0.0
    %511 = vmatmul.mubr.f32.gmra.mxu0 %v417
    %v512 = vpop.f32.mrf.mxu0
    %v513 = vadd.f32 %v382, %v512
    %v514 = vpop.f32.mrf.mxu0
    %v515 = vadd.f32 %v382, %v514
    %516 = vmatprep.mubr.f32.mxu0 0.0
    %517 = vmatmul.mubr.f32.gmra.mxu0 %v420
    %v518 = vpop.f32.mrf.mxu0
    %v519 = vadd.f32 %v387, %v518
    %v520 = vpop.f32.mrf.mxu0
    %v521 = vadd.f32 %v387, %v520
    %522 = vmatprep.mubr.f32.mxu0 0.0
    %523 = vmatmul.mubr.f32.gmra.mxu0 %v423
    %v524 = vpop.f32.mrf.mxu0
    %v525 = vadd.f32 %v392, %v524
    %v526 = vpop.f32.mrf.mxu0
    %v527 = vadd.f32 %v392, %v526
    %528 = vmatprep.mubr.f32.mxu0 0.0
    %529 = vmatmul.mubr.f32.gmra.mxu0 %v426
    %v530 = vpop.f32.mrf.mxu0
    %v531 = vadd.f32 %v397, %v530
    %v532 = vpop.f32.mrf.mxu0
    %v533 = vadd.f32 %v397, %v532
    %534 = vmatprep.mubr.f32.mxu0 0.0
    %535 = vmatmul.mubr.f32.gmra.mxu0 %v429
    %v536 = vpop.f32.mrf.mxu0
    %v537 = vadd.f32 %v402, %v536
    %v538 = vpop.f32.mrf.mxu0
    %v539 = vadd.f32 %v402, %v538
    %540 = vmatprep.mubr.f32.mxu0 0.0
    %541 = vmatmul.mubr.f32.gmra.mxu0 %v432
    %v542 = vpop.f32.mrf.mxu0
    %v543 = vadd.f32 %v407, %v542
    %v544 = vpop.f32.mrf.mxu0
    %v545 = vadd.f32 %v407, %v544
    %546 = vdwg.mxu0
    %547 = vmatprep.subr.mxu0 0.0
    %548 = vmatpush1.msra.mxu0 0.0
    %549 = vmatprep.subr.mxu0 0.0
    %550 = vmatpush1.msra.mxu0 0.0
    %551 = vmatprep.subr.mxu0 0.0
    %552 = vmatpush1.msra.mxu0 0.0
    %553 = vmatprep.subr.mxu0 0.0
    %554 = vmatpush1.msra.mxu0 0.0
    %555 = vmatprep.subr.mxu0 0.0
    %556 = vmatpush1.msra.mxu0 0.0
    %557 = vmatprep.subr.mxu0 0.0
    %558 = vmatpush1.msra.mxu0 0.0
    %559 = vmatprep.subr.mxu0 0.0
    %560 = vmatpush1.msra.mxu0 0.0
    %561 = vmatprep.subr.mxu0 0.0
    %562 = vmatpush1.msra.mxu0 0.0
    %563 = vmatprep.subr.mxu0 0.0
    %564 = vmatpush1.msra.mxu0 0.0
    %565 = vmatprep.subr.mxu0 0.0
    %566 = vmatpush1.msra.mxu0 0.0
    %567 = vmatprep.subr.mxu0 0.0
    %568 = vmatpush1.msra.mxu0 0.0
    %569 = vmatprep.subr.mxu0 0.0
    %570 = vmatpush1.msra.mxu0 0.0
    %571 = vmatprep.subr.mxu0 %v351
    %572 = vmatpush1.msra.mxu0 %v350
    %573 = vmatprep.subr.mxu0 %v346
    %574 = vmatpush1.msra.mxu0 %v345
    %575 = vmatprep.subr.mxu0 %v341
    %576 = vmatpush1.msra.mxu0 %v340
    %577 = vmatprep.subr.mxu0 %v336
    %578 = vmatpush1.msra.mxu0 %v335
    %579 = vmatprep.subr.mxu0 0.0
    %580 = vmatpush2.msra.mxu0 0.0
    %581 = vmatprep.subr.mxu0 0.0
    %582 = vmatpush2.msra.mxu0 0.0
    %583 = vmatprep.subr.mxu0 0.0
    %584 = vmatpush2.msra.mxu0 0.0
    %585 = vmatprep.subr.mxu0 0.0
    %586 = vmatpush2.msra.mxu0 0.0
    %587 = vmatprep.subr.mxu0 0.0
    %588 = vmatpush2.msra.mxu0 0.0
    %589 = vmatprep.subr.mxu0 0.0
    %590 = vmatpush2.msra.mxu0 0.0
    %591 = vmatprep.subr.mxu0 0.0
    %592 = vmatpush2.msra.mxu0 0.0
    %593 = vmatprep.subr.mxu0 0.0
    %594 = vmatpush2.msra.mxu0 0.0
    %595 = vmatprep.subr.mxu0 0.0
    %596 = vmatpush2.msra.mxu0 0.0
    %597 = vmatprep.subr.mxu0 0.0
    %598 = vmatpush2.msra.mxu0 0.0
    %599 = vmatprep.subr.mxu0 0.0
    %600 = vmatpush2.msra.mxu0 0.0
    %601 = vmatprep.subr.mxu0 0.0
    %602 = vmatpush2.msra.mxu0 0.0
    %603 = vmatprep.subr.mxu0 0.0
    %604 = vmatpush2.msra.mxu0 0.0
    %605 = vmatprep.subr.mxu0 0.0
    %606 = vmatpush2.msra.mxu0 0.0
    %607 = vmatprep.subr.mxu0 0.0
    %608 = vmatpush2.msra.mxu0 0.0
    %609 = vmatprep.subr.mxu0 0.0
    %610 = vmatpush2.msra.mxu0 0.0
    %611 = vmatprep.mubr.f32.mxu0 0.0
    %612 = vmatmul.mubr.f32.gmra.mxu0 %v411
    %v613 = vpop.f32.mrf.mxu0
    %v614 = vadd.f32 %v372, %v613
    %v615 = vpop.f32.mrf.mxu0
    %v616 = vadd.f32 %v372, %v615
    %617 = vmatprep.mubr.f32.mxu0 0.0
    %618 = vmatmul.mubr.f32.gmra.mxu0 %v414
    %v619 = vpop.f32.mrf.mxu0
    %v620 = vadd.f32 %v377, %v619
    %v621 = vpop.f32.mrf.mxu0
    %v622 = vadd.f32 %v377, %v621
    %623 = vmatprep.mubr.f32.mxu0 0.0
    %624 = vmatmul.mubr.f32.gmra.mxu0 %v417
    %v625 = vpop.f32.mrf.mxu0
    %v626 = vadd.f32 %v382, %v625
    %v627 = vpop.f32.mrf.mxu0
    %v628 = vadd.f32 %v382, %v627
    %629 = vmatprep.mubr.f32.mxu0 0.0
    %630 = vmatmul.mubr.f32.gmra.mxu0 %v420
    %v631 = vpop.f32.mrf.mxu0
    %v632 = vadd.f32 %v387, %v631
    %v633 = vpop.f32.mrf.mxu0
    %v634 = vadd.f32 %v387, %v633
    %635 = vmatprep.mubr.f32.mxu0 0.0
    %636 = vmatmul.mubr.f32.gmra.mxu0 %v423
    %v637 = vpop.f32.mrf.mxu0
    %v638 = vadd.f32 %v392, %v637
    %v639 = vpop.f32.mrf.mxu0
    %v640 = vadd.f32 %v392, %v639
    %641 = vmatprep.mubr.f32.mxu0 0.0
    %642 = vmatmul.mubr.f32.gmra.mxu0 %v426
    %v643 = vpop.f32.mrf.mxu0
    %v644 = vadd.f32 %v397, %v643
    %v645 = vpop.f32.mrf.mxu0
    %v646 = vadd.f32 %v397, %v645
    %647 = vmatprep.mubr.f32.mxu0 0.0
    %648 = vmatmul.mubr.f32.gmra.mxu0 %v429
    %v649 = vpop.f32.mrf.mxu0
    %v650 = vadd.f32 %v402, %v649
    %v651 = vpop.f32.mrf.mxu0
    %v652 = vadd.f32 %v402, %v651
    %653 = vmatprep.mubr.f32.mxu0 0.0
    %654 = vmatmul.mubr.f32.gmra.mxu0 %v432
    %v655 = vpop.f32.mrf.mxu0
    %v656 = vadd.f32 %v407, %v655
    %v657 = vpop.f32.mrf.mxu0
    %v658 = vadd.f32 %v407, %v657
    %659 = vdwg.mxu0
    %660 = vmatprep.subr.mxu0 0.0
    %661 = vmatpush1.msra.mxu0 0.0
    %662 = vmatprep.subr.mxu0 0.0
    %663 = vmatpush1.msra.mxu0 0.0
    %664 = vmatprep.subr.mxu0 0.0
    %665 = vmatpush1.msra.mxu0 0.0
    %666 = vmatprep.subr.mxu0 0.0
    %667 = vmatpush1.msra.mxu0 0.0
    %668 = vmatprep.subr.mxu0 0.0
    %669 = vmatpush1.msra.mxu0 0.0
    %670 = vmatprep.subr.mxu0 0.0
    %671 = vmatpush1.msra.mxu0 0.0
    %672 = vmatprep.subr.mxu0 0.0
    %673 = vmatpush1.msra.mxu0 0.0
    %674 = vmatprep.subr.mxu0 0.0
    %675 = vmatpush1.msra.mxu0 0.0
    %676 = vmatprep.subr.mxu0 0.0
    %677 = vmatpush1.msra.mxu0 0.0
    %678 = vmatprep.subr.mxu0 0.0
    %679 = vmatpush1.msra.mxu0 0.0
    %680 = vmatprep.subr.mxu0 0.0
    %681 = vmatpush1.msra.mxu0 0.0
    %682 = vmatprep.subr.mxu0 0.0
    %683 = vmatpush1.msra.mxu0 0.0
    %684 = vmatprep.subr.mxu0 0.0
    %685 = vmatpush1.msra.mxu0 %v352
    %686 = vmatprep.subr.mxu0 0.0
    %687 = vmatpush1.msra.mxu0 %v347
    %688 = vmatprep.subr.mxu0 0.0
    %689 = vmatpush1.msra.mxu0 %v342
    %690 = vmatprep.subr.mxu0 0.0
    %691 = vmatpush1.msra.mxu0 %v337
    %692 = vmatprep.subr.mxu0 0.0
    %693 = vmatpush2.msra.mxu0 0.0
    %694 = vmatprep.subr.mxu0 0.0
    %695 = vmatpush2.msra.mxu0 0.0
    %696 = vmatprep.subr.mxu0 0.0
    %697 = vmatpush2.msra.mxu0 0.0
    %698 = vmatprep.subr.mxu0 0.0
    %699 = vmatpush2.msra.mxu0 0.0
    %700 = vmatprep.subr.mxu0 0.0
    %701 = vmatpush2.msra.mxu0 0.0
    %702 = vmatprep.subr.mxu0 0.0
    %703 = vmatpush2.msra.mxu0 0.0
    %704 = vmatprep.subr.mxu0 0.0
    %705 = vmatpush2.msra.mxu0 0.0
    %706 = vmatprep.subr.mxu0 0.0
    %707 = vmatpush2.msra.mxu0 0.0
    %708 = vmatprep.subr.mxu0 0.0
    %709 = vmatpush2.msra.mxu0 0.0
    %710 = vmatprep.subr.mxu0 0.0
    %711 = vmatpush2.msra.mxu0 0.0
    %712 = vmatprep.subr.mxu0 0.0
    %713 = vmatpush2.msra.mxu0 0.0
    %714 = vmatprep.subr.mxu0 0.0
    %715 = vmatpush2.msra.mxu0 0.0
    %716 = vmatprep.subr.mxu0 0.0
    %717 = vmatpush2.msra.mxu0 0.0
    %718 = vmatprep.subr.mxu0 0.0
    %719 = vmatpush2.msra.mxu0 0.0
    %720 = vmatprep.subr.mxu0 0.0
    %721 = vmatpush2.msra.mxu0 0.0
    %722 = vmatprep.subr.mxu0 0.0
    %723 = vmatpush2.msra.mxu0 0.0
    %724 = vmatprep.mubr.f32.mxu0 0.0
    %725 = vmatmul.mubr.f32.gmra.mxu0 %v411
    %v726 = vpop.f32.mrf.mxu0
    %v727 = vadd.f32 %v372, %v726
    %v728 = vpop.f32.mrf.mxu0
    %729 = vmatprep.mubr.f32.mxu0 0.0
    %730 = vmatmul.mubr.f32.gmra.mxu0 %v414
    %v731 = vpop.f32.mrf.mxu0
    %v732 = vadd.f32 %v377, %v731
    %v733 = vpop.f32.mrf.mxu0
    %734 = vmatprep.mubr.f32.mxu0 0.0
    %735 = vmatmul.mubr.f32.gmra.mxu0 %v417
    %v736 = vpop.f32.mrf.mxu0
    %v737 = vadd.f32 %v382, %v736
    %v738 = vpop.f32.mrf.mxu0
    %739 = vmatprep.mubr.f32.mxu0 0.0
    %740 = vmatmul.mubr.f32.gmra.mxu0 %v420
    %v741 = vpop.f32.mrf.mxu0
    %v742 = vadd.f32 %v387, %v741
    %v743 = vpop.f32.mrf.mxu0
    %744 = vmatprep.mubr.f32.mxu0 0.0
    %745 = vmatmul.mubr.f32.gmra.mxu0 %v423
    %v746 = vpop.f32.mrf.mxu0
    %v747 = vadd.f32 %v392, %v746
    %v748 = vpop.f32.mrf.mxu0
    %749 = vmatprep.mubr.f32.mxu0 0.0
    %750 = vmatmul.mubr.f32.gmra.mxu0 %v426
    %v751 = vpop.f32.mrf.mxu0
    %v752 = vadd.f32 %v397, %v751
    %v753 = vpop.f32.mrf.mxu0
    %754 = vmatprep.mubr.f32.mxu0 0.0
    %755 = vmatmul.mubr.f32.gmra.mxu0 %v429
    %v756 = vpop.f32.mrf.mxu0
    %v757 = vadd.f32 %v402, %v756
    %v758 = vpop.f32.mrf.mxu0
    %759 = vmatprep.mubr.f32.mxu0 0.0
    %760 = vmatmul.mubr.f32.gmra.mxu0 %v432
    %v761 = vpop.f32.mrf.mxu0
    %v762 = vadd.f32 %v407, %v761
    %v763 = vpop.f32.mrf.mxu0
    %764 = vdwg.mxu0
    %v765 = vmax.f32 %v501, 0.0
    %v766 = vmax.f32 %v503, 0.0
    %v767 = vmax.f32 %v614, 0.0
    %v768 = vmax.f32 %v616, 0.0
    %v769 = vmax.f32 %v727, 0.0
    %v770 = vmax.f32 %v507, 0.0
    %v771 = vmax.f32 %v509, 0.0
    %v772 = vmax.f32 %v620, 0.0
    %v773 = vmax.f32 %v622, 0.0
    %v774 = vmax.f32 %v732, 0.0
    %v775 = vmax.f32 %v513, 0.0
    %v776 = vmax.f32 %v515, 0.0
    %v777 = vmax.f32 %v626, 0.0
    %v778 = vmax.f32 %v628, 0.0
    %v779 = vmax.f32 %v737, 0.0
    %v780 = vmax.f32 %v519, 0.0
    %v781 = vmax.f32 %v521, 0.0
    %v782 = vmax.f32 %v632, 0.0
    %v783 = vmax.f32 %v634, 0.0
    %v784 = vmax.f32 %v742, 0.0
    %v785 = vmax.f32 %v525, 0.0
    %v786 = vmax.f32 %v527, 0.0
    %v787 = vmax.f32 %v638, 0.0
    %v788 = vmax.f32 %v640, 0.0
    %v789 = vmax.f32 %v747, 0.0
    %v790 = vmax.f32 %v531, 0.0
    %v791 = vmax.f32 %v533, 0.0
    %v792 = vmax.f32 %v644, 0.0
    %v793 = vmax.f32 %v646, 0.0
    %v794 = vmax.f32 %v752, 0.0
    %v795 = vmax.f32 %v537, 0.0
    %v796 = vmax.f32 %v539, 0.0
    %v797 = vmax.f32 %v650, 0.0
    %v798 = vmax.f32 %v652, 0.0
    %v799 = vmax.f32 %v757, 0.0
    %v800 = vmax.f32 %v543, 0.0
    %v801 = vmax.f32 %v545, 0.0
    %v802 = vmax.f32 %v656, 0.0
    %v803 = vmax.f32 %v658, 0.0
    %v804 = vmax.f32 %v762, 0.0
    %v805 = vld [vmem:[%s5] sm:$0x1f]
    %v806 = vld [vmem:[%s6] sm:$0x1f]
    %808 = vset.pattern.permute.xlu0 0
    %809 = vperm.xlu0 %808, %v806
    %v810 = vpop.permute.xlu0 %809
    %vm812 = vcmask 523264
    %v814 = vsel %vm812, %v805, 0
    %816 = vmatprep.subr.mxu0 0.0
    %817 = vmatpush1.msra.mxu0 0.0
    %818 = vmatprep.subr.mxu0 0.0
    %819 = vmatpush1.msra.mxu0 0.0
    %820 = vmatprep.subr.mxu0 0.0
    %821 = vmatpush1.msra.mxu0 0.0
    %822 = vmatprep.subr.mxu0 0.0
    %823 = vmatpush1.msra.mxu0 0.0
    %824 = vmatprep.subr.mxu0 0.0
    %825 = vmatpush1.msra.mxu0 0.0
    %826 = vmatprep.subr.mxu0 0.0
    %827 = vmatpush1.msra.mxu0 0.0
    %828 = vmatprep.subr.mxu0 0.0
    %829 = vmatpush1.msra.mxu0 0.0
    %830 = vmatprep.subr.mxu0 0.0
    %831 = vmatpush1.msra.mxu0 0.0
    %832 = vmatprep.subr.mxu0 %v801
    %833 = vmatpush1.msra.mxu0 %v800
    %834 = vmatprep.subr.mxu0 %v796
    %835 = vmatpush1.msra.mxu0 %v795
    %836 = vmatprep.subr.mxu0 %v791
    %837 = vmatpush1.msra.mxu0 %v790
    %838 = vmatprep.subr.mxu0 %v786
    %839 = vmatpush1.msra.mxu0 %v785
    %840 = vmatprep.subr.mxu0 %v781
    %841 = vmatpush1.msra.mxu0 %v780
    %842 = vmatprep.subr.mxu0 %v776
    %843 = vmatpush1.msra.mxu0 %v775
    %844 = vmatprep.subr.mxu0 %v771
    %845 = vmatpush1.msra.mxu0 %v770
    %846 = vmatprep.subr.mxu0 %v766
    %847 = vmatpush1.msra.mxu0 %v765
    %848 = vmatprep.subr.mxu0 0.0
    %849 = vmatpush2.msra.mxu0 0.0
    %850 = vmatprep.subr.mxu0 0.0
    %851 = vmatpush2.msra.mxu0 0.0
    %852 = vmatprep.subr.mxu0 0.0
    %853 = vmatpush2.msra.mxu0 0.0
    %854 = vmatprep.subr.mxu0 0.0
    %855 = vmatpush2.msra.mxu0 0.0
    %856 = vmatprep.subr.mxu0 0.0
    %857 = vmatpush2.msra.mxu0 0.0
    %858 = vmatprep.subr.mxu0 0.0
    %859 = vmatpush2.msra.mxu0 0.0
    %860 = vmatprep.subr.mxu0 0.0
    %861 = vmatpush2.msra.mxu0 0.0
    %862 = vmatprep.subr.mxu0 0.0
    %863 = vmatpush2.msra.mxu0 0.0
    %864 = vmatprep.subr.mxu0 0.0
    %865 = vmatpush2.msra.mxu0 0.0
    %866 = vmatprep.subr.mxu0 0.0
    %867 = vmatpush2.msra.mxu0 0.0
    %868 = vmatprep.subr.mxu0 0.0
    %869 = vmatpush2.msra.mxu0 0.0
    %870 = vmatprep.subr.mxu0 0.0
    %871 = vmatpush2.msra.mxu0 0.0
    %872 = vmatprep.subr.mxu0 0.0
    %873 = vmatpush2.msra.mxu0 0.0
    %874 = vmatprep.subr.mxu0 0.0
    %875 = vmatpush2.msra.mxu0 0.0
    %876 = vmatprep.subr.mxu0 0.0
    %877 = vmatpush2.msra.mxu0 0.0
    %878 = vmatprep.subr.mxu0 0.0
    %879 = vmatpush2.msra.mxu0 0.0
    %880 = vmatprep.mubr.f32.mxu0 0.0
    %881 = vmatmul.mubr.f32.gmra.mxu0 %v814
    %v882 = vpop.f32.mrf.mxu0
    %v883 = vadd.f32 %v810, %v882
    %v884 = vpop.f32.mrf.mxu0
    %v885 = vadd.f32 %v810, %v884
    %886 = vdwg.mxu0
    %887 = vmatprep.subr.mxu0 0.0
    %888 = vmatpush1.msra.mxu0 0.0
    %889 = vmatprep.subr.mxu0 0.0
    %890 = vmatpush1.msra.mxu0 0.0
    %891 = vmatprep.subr.mxu0 0.0
    %892 = vmatpush1.msra.mxu0 0.0
    %893 = vmatprep.subr.mxu0 0.0
    %894 = vmatpush1.msra.mxu0 0.0
    %895 = vmatprep.subr.mxu0 0.0
    %896 = vmatpush1.msra.mxu0 0.0
    %897 = vmatprep.subr.mxu0 0.0
    %898 = vmatpush1.msra.mxu0 0.0
    %899 = vmatprep.subr.mxu0 0.0
    %900 = vmatpush1.msra.mxu0 0.0
    %901 = vmatprep.subr.mxu0 0.0
    %902 = vmatpush1.msra.mxu0 0.0
    %903 = vmatprep.subr.mxu0 %v803
    %904 = vmatpush1.msra.mxu0 %v802
    %905 = vmatprep.subr.mxu0 %v798
    %906 = vmatpush1.msra.mxu0 %v797
    %907 = vmatprep.subr.mxu0 %v793
    %908 = vmatpush1.msra.mxu0 %v792
    %909 = vmatprep.subr.mxu0 %v788
    %910 = vmatpush1.msra.mxu0 %v787
    %911 = vmatprep.subr.mxu0 %v783
    %912 = vmatpush1.msra.mxu0 %v782
    %913 = vmatprep.subr.mxu0 %v778
    %914 = vmatpush1.msra.mxu0 %v777
    %915 = vmatprep.subr.mxu0 %v773
    %916 = vmatpush1.msra.mxu0 %v772
    %917 = vmatprep.subr.mxu0 %v768
    %918 = vmatpush1.msra.mxu0 %v767
    %919 = vmatprep.subr.mxu0 0.0
    %920 = vmatpush2.msra.mxu0 0.0
    %921 = vmatprep.subr.mxu0 0.0
    %922 = vmatpush2.msra.mxu0 0.0
    %923 = vmatprep.subr.mxu0 0.0
    %924 = vmatpush2.msra.mxu0 0.0
    %925 = vmatprep.subr.mxu0 0.0
    %926 = vmatpush2.msra.mxu0 0.0
    %927 = vmatprep.subr.mxu0 0.0
    %928 = vmatpush2.msra.mxu0 0.0
    %929 = vmatprep.subr.mxu0 0.0
    %930 = vmatpush2.msra.mxu0 0.0
    %931 = vmatprep.subr.mxu0 0.0
    %932 = vmatpush2.msra.mxu0 0.0
    %933 = vmatprep.subr.mxu0 0.0
    %934 = vmatpush2.msra.mxu0 0.0
    %935 = vmatprep.subr.mxu0 0.0
    %936 = vmatpush2.msra.mxu0 0.0
    %937 = vmatprep.subr.mxu0 0.0
    %938 = vmatpush2.msra.mxu0 0.0
    %939 = vmatprep.subr.mxu0 0.0
    %940 = vmatpush2.msra.mxu0 0.0
    %941 = vmatprep.subr.mxu0 0.0
    %942 = vmatpush2.msra.mxu0 0.0
    %943 = vmatprep.subr.mxu0 0.0
    %944 = vmatpush2.msra.mxu0 0.0
    %945 = vmatprep.subr.mxu0 0.0
    %946 = vmatpush2.msra.mxu0 0.0
    %947 = vmatprep.subr.mxu0 0.0
    %948 = vmatpush2.msra.mxu0 0.0
    %949 = vmatprep.subr.mxu0 0.0
    %950 = vmatpush2.msra.mxu0 0.0
    %951 = vmatprep.mubr.f32.mxu0 0.0
    %952 = vmatmul.mubr.f32.gmra.mxu0 %v814
    %v953 = vpop.f32.mrf.mxu0
    %v954 = vadd.f32 %v810, %v953
    %v955 = vpop.f32.mrf.mxu0
    %v956 = vadd.f32 %v810, %v955
    %957 = vdwg.mxu0
    %958 = vmatprep.subr.mxu0 0.0
    %959 = vmatpush1.msra.mxu0 0.0
    %960 = vmatprep.subr.mxu0 0.0
    %961 = vmatpush1.msra.mxu0 0.0
    %962 = vmatprep.subr.mxu0 0.0
    %963 = vmatpush1.msra.mxu0 0.0
    %964 = vmatprep.subr.mxu0 0.0
    %965 = vmatpush1.msra.mxu0 0.0
    %966 = vmatprep.subr.mxu0 0.0
    %967 = vmatpush1.msra.mxu0 0.0
    %968 = vmatprep.subr.mxu0 0.0
    %969 = vmatpush1.msra.mxu0 0.0
    %970 = vmatprep.subr.mxu0 0.0
    %971 = vmatpush1.msra.mxu0 0.0
    %972 = vmatprep.subr.mxu0 0.0
    %973 = vmatpush1.msra.mxu0 0.0
    %974 = vmatprep.subr.mxu0 0.0
    %975 = vmatpush1.msra.mxu0 %v804
    %976 = vmatprep.subr.mxu0 0.0
    %977 = vmatpush1.msra.mxu0 %v799
    %978 = vmatprep.subr.mxu0 0.0
    %979 = vmatpush1.msra.mxu0 %v794
    %980 = vmatprep.subr.mxu0 0.0
    %981 = vmatpush1.msra.mxu0 %v789
    %982 = vmatprep.subr.mxu0 0.0
    %983 = vmatpush1.msra.mxu0 %v784
    %984 = vmatprep.subr.mxu0 0.0
    %985 = vmatpush1.msra.mxu0 %v779
    %986 = vmatprep.subr.mxu0 0.0
    %987 = vmatpush1.msra.mxu0 %v774
    %988 = vmatprep.subr.mxu0 0.0
    %989 = vmatpush1.msra.mxu0 %v769
    %990 = vmatprep.subr.mxu0 0.0
    %991 = vmatpush2.msra.mxu0 0.0
    %992 = vmatprep.subr.mxu0 0.0
    %993 = vmatpush2.msra.mxu0 0.0
    %994 = vmatprep.subr.mxu0 0.0
    %995 = vmatpush2.msra.mxu0 0.0
    %996 = vmatprep.subr.mxu0 0.0
    %997 = vmatpush2.msra.mxu0 0.0
    %998 = vmatprep.subr.mxu0 0.0
    %999 = vmatpush2.msra.mxu0 0.0
    %1000 = vmatprep.subr.mxu0 0.0
    %1001 = vmatpush2.msra.mxu0 0.0
    %1002 = vmatprep.subr.mxu0 0.0
    %1003 = vmatpush2.msra.mxu0 0.0
    %1004 = vmatprep.subr.mxu0 0.0
    %1005 = vmatpush2.msra.mxu0 0.0
    %1006 = vmatprep.subr.mxu0 0.0
    %1007 = vmatpush2.msra.mxu0 0.0
    %1008 = vmatprep.subr.mxu0 0.0
    %1009 = vmatpush2.msra.mxu0 0.0
    %1010 = vmatprep.subr.mxu0 0.0
    %1011 = vmatpush2.msra.mxu0 0.0
    %1012 = vmatprep.subr.mxu0 0.0
    %1013 = vmatpush2.msra.mxu0 0.0
    %1014 = vmatprep.subr.mxu0 0.0
    %1015 = vmatpush2.msra.mxu0 0.0
    %1016 = vmatprep.subr.mxu0 0.0
    %1017 = vmatpush2.msra.mxu0 0.0
    %1018 = vmatprep.subr.mxu0 0.0
    %1019 = vmatpush2.msra.mxu0 0.0
    %1020 = vmatprep.subr.mxu0 0.0
    %1021 = vmatpush2.msra.mxu0 0.0
    %1022 = vmatprep.mubr.f32.mxu0 0.0
    %1023 = vmatmul.mubr.f32.gmra.mxu0 %v814
    %v1024 = vpop.f32.mrf.mxu0
    %v1025 = vadd.f32 %v810, %v1024
    %v1026 = vpop.f32.mrf.mxu0
    %1027 = vdwg.mxu0
    %v1028 = vtanh.pop %v883
    %v1029 = vtanh.pop %v885
    %v1030 = vtanh.pop %v954
    %v1031 = vtanh.pop %v956
    %v1032 = vtanh.pop %v1025
    %v1033 = vrcp.pop %v27
    %v1034 = vrcp.pop %v28
    %v1035 = vrcp.pop %v29
    %v1036 = vrcp.pop %v30
    %v1037 = vrcp.pop %v31
    %v1038 = vlaneseq
    %v1039 = vshrl.u32 %v1038, 7
    %v1040 = vsub.s32 3, %v1039
    %v1041 = vrot.slane %v1033, %v1040
    %v1042 = vlaneseq
    %v1043 = vshrl.u32 %v1042, 7
    %v1044 = vsub.s32 3, %v1043
    %v1045 = vrot.slane %v1034, %v1044
    %v1046 = vlaneseq
    %v1047 = vshrl.u32 %v1046, 7
    %v1048 = vsub.s32 3, %v1047
    %v1049 = vrot.slane %v1035, %v1048
    %v1050 = vlaneseq
    %v1051 = vshrl.u32 %v1050, 7
    %v1052 = vsub.s32 3, %v1051
    %v1053 = vrot.slane %v1036, %v1052
    %v1054 = vlaneseq
    %v1055 = vshrl.u32 %v1054, 7
    %v1056 = vsub.s32 3, %v1055
    %v1057 = vrot.slane %v1037, %v1056
    %v1058 = vmul.f32 %v27, %v1041
    %v1059 = vmul.f32 %v28, %v1045
    %v1060 = vmul.f32 %v29, %v1049
    %v1061 = vmul.f32 %v30, %v1053
    %v1062 = vmul.f32 %v31, %v1057
    %v1063 = vmul.f32 %v1058, %v32
    %v1064 = vmul.f32 %v1059, %v33
    %v1065 = vmul.f32 %v1060, %v34
    %v1066 = vmul.f32 %v1061, %v35
    %v1067 = vmul.f32 %v1062, %v36
    %v1073 = vrot.slane %v32, 3
    %v1074 = vrot.slane %v33, 3
    %v1075 = vrot.slane %v34, 3
    %v1076 = vrot.slane %v35, 3
    %v1077 = vrot.slane %v36, 3
    %v1083 = vmul.f32 %v1058, %v1073
    %v1084 = vmul.f32 %v1059, %v1074
    %v1085 = vmul.f32 %v1060, %v1075
    %v1086 = vmul.f32 %v1061, %v1076
    %v1087 = vmul.f32 %v1062, %v1077
    %v1093 = vrot.slane %v1063, 1
    %v1094 = vrot.slane %v1064, 1
    %v1095 = vrot.slane %v1065, 1
    %v1096 = vrot.slane %v1066, 1
    %v1097 = vrot.slane %v1067, 1
    %v1103 = vadd.f32 %v1063, %v1093
    %v1104 = vadd.f32 %v1064, %v1094
    %v1105 = vadd.f32 %v1065, %v1095
    %v1106 = vadd.f32 %v1066, %v1096
    %v1107 = vadd.f32 %v1067, %v1097
    %v1108 = vrot.slane %v1063, 2
    %v1109 = vrot.slane %v1064, 2
    %v1110 = vrot.slane %v1065, 2
    %v1111 = vrot.slane %v1066, 2
    %v1112 = vrot.slane %v1067, 2
    %v1118 = vadd.f32 %v1103, %v1108
    %v1119 = vadd.f32 %v1104, %v1109
    %v1120 = vadd.f32 %v1105, %v1110
    %v1121 = vadd.f32 %v1106, %v1111
    %v1122 = vadd.f32 %v1107, %v1112
    %v1128 = vrot.slane %v1083, 1
    %v1129 = vrot.slane %v1084, 1
    %v1130 = vrot.slane %v1085, 1
    %v1131 = vrot.slane %v1086, 1
    %v1132 = vrot.slane %v1087, 1
    %v1138 = vadd.f32 %v1083, %v1128
    %v1139 = vadd.f32 %v1084, %v1129
    %v1140 = vadd.f32 %v1085, %v1130
    %v1141 = vadd.f32 %v1086, %v1131
    %v1142 = vadd.f32 %v1087, %v1132
    %v1143 = vrot.slane %v1083, 2
    %v1144 = vrot.slane %v1084, 2
    %v1145 = vrot.slane %v1085, 2
    %v1146 = vrot.slane %v1086, 2
    %v1147 = vrot.slane %v1087, 2
    %v1153 = vadd.f32 %v1138, %v1143
    %v1154 = vadd.f32 %v1139, %v1144
    %v1155 = vadd.f32 %v1140, %v1145
    %v1156 = vadd.f32 %v1141, %v1146
    %v1157 = vadd.f32 %v1142, %v1147
    %v1163 = vrot.slane %v1028, 1
    %v1164 = vrot.slane %v1029, 1
    %v1165 = vrot.slane %v1030, 1
    %v1166 = vrot.slane %v1031, 1
    %v1167 = vrot.slane %v1032, 1
    %v1173 = vsub.f32 %v1028, %v1163
    %v1174 = vsub.f32 %v1029, %v1164
    %v1175 = vsub.f32 %v1030, %v1165
    %v1176 = vsub.f32 %v1031, %v1166
    %v1177 = vsub.f32 %v1032, %v1167
    %v1178 = vmul.f32 %v1173, %v1118
    %v1179 = vmul.f32 %v1174, %v1119
    %v1180 = vmul.f32 %v1175, %v1120
    %v1181 = vmul.f32 %v1176, %v1121
    %v1182 = vmul.f32 %v1177, %v1122
    %v1188 = vrot.slane %v1153, 5
    %v1189 = vrot.slane %v1154, 5
    %v1190 = vrot.slane %v1155, 5
    %v1191 = vrot.slane %v1156, 5
    %v1192 = vrot.slane %v1157, 5
    %v1198 = vmul.f32 %v1173, %v1188
    %v1199 = vmul.f32 %v1174, %v1189
    %v1200 = vmul.f32 %v1175, %v1190
    %v1201 = vmul.f32 %v1176, %v1191
    %v1202 = vmul.f32 %v1177, %v1192
    %v1203 = vlaneseq
    %v1204 = vshrl.u32 %v1203, 7
    %v1205 = vsub.s32 1, %v1204
    %v1206 = vrot.slane %v1028, %v1205
    %v1207 = vlaneseq
    %v1208 = vshrl.u32 %v1207, 7
    %v1209 = vsub.s32 1, %v1208
    %v1210 = vrot.slane %v1029, %v1209
    %v1211 = vlaneseq
    %v1212 = vshrl.u32 %v1211, 7
    %v1213 = vsub.s32 1, %v1212
    %v1214 = vrot.slane %v1030, %v1213
    %v1215 = vlaneseq
    %v1216 = vshrl.u32 %v1215, 7
    %v1217 = vsub.s32 1, %v1216
    %v1218 = vrot.slane %v1031, %v1217
    %v1219 = vlaneseq
    %v1220 = vshrl.u32 %v1219, 7
    %v1221 = vsub.s32 1, %v1220
    %v1222 = vrot.slane %v1032, %v1221
    %v1223 = vmul.f32 %v1206, %v32
    %v1224 = vmul.f32 %v1210, %v33
    %v1225 = vmul.f32 %v1214, %v34
    %v1226 = vmul.f32 %v1218, %v35
    %v1227 = vmul.f32 %v1222, %v36
    %v1228 = vlaneseq
    %v1229 = vshrl.u32 %v1228, 7
    %v1230 = vsub.s32 0, %v1229
    %v1231 = vrot.slane %v1178, %v1230
    %v1232 = vlaneseq
    %v1233 = vshrl.u32 %v1232, 7
    %v1234 = vsub.s32 0, %v1233
    %v1235 = vrot.slane %v1179, %v1234
    %v1236 = vlaneseq
    %v1237 = vshrl.u32 %v1236, 7
    %v1238 = vsub.s32 0, %v1237
    %v1239 = vrot.slane %v1180, %v1238
    %v1240 = vlaneseq
    %v1241 = vshrl.u32 %v1240, 7
    %v1242 = vsub.s32 0, %v1241
    %v1243 = vrot.slane %v1181, %v1242
    %v1244 = vlaneseq
    %v1245 = vshrl.u32 %v1244, 7
    %v1246 = vsub.s32 0, %v1245
    %v1247 = vrot.slane %v1182, %v1246
    %v1248 = vmul.f32 %v1231, %v1058
    %v1249 = vmul.f32 %v1235, %v1059
    %v1250 = vmul.f32 %v1239, %v1060
    %v1251 = vmul.f32 %v1243, %v1061
    %v1252 = vmul.f32 %v1247, %v1062
    %v1253 = vadd.f32 %v1223, %v1248
    %v1254 = vadd.f32 %v1224, %v1249
    %v1255 = vadd.f32 %v1225, %v1250
    %v1256 = vadd.f32 %v1226, %v1251
    %v1257 = vadd.f32 %v1227, %v1252
    %v1258 = vlaneseq
    %v1259 = vshrl.u32 %v1258, 7
    %v1260 = vsub.s32 4, %v1259
    %v1261 = vrot.slane %v1028, %v1260
    %v1262 = vlaneseq
    %v1263 = vshrl.u32 %v1262, 7
    %v1264 = vsub.s32 4, %v1263
    %v1265 = vrot.slane %v1029, %v1264
    %v1266 = vlaneseq
    %v1267 = vshrl.u32 %v1266, 7
    %v1268 = vsub.s32 4, %v1267
    %v1269 = vrot.slane %v1030, %v1268
    %v1270 = vlaneseq
    %v1271 = vshrl.u32 %v1270, 7
    %v1272 = vsub.s32 4, %v1271
    %v1273 = vrot.slane %v1031, %v1272
    %v1274 = vlaneseq
    %v1275 = vshrl.u32 %v1274, 7
    %v1276 = vsub.s32 4, %v1275
    %v1277 = vrot.slane %v1032, %v1276
    %v1278 = vmul.f32 %v1261, %v32
    %v1279 = vmul.f32 %v1265, %v33
    %v1280 = vmul.f32 %v1269, %v34
    %v1281 = vmul.f32 %v1273, %v35
    %v1282 = vmul.f32 %v1277, %v36
    %v1283 = vlaneseq
    %v1284 = vshrl.u32 %v1283, 7
    %v1285 = vsub.s32 3, %v1284
    %v1286 = vrot.slane %v1198, %v1285
    %v1287 = vlaneseq
    %v1288 = vshrl.u32 %v1287, 7
    %v1289 = vsub.s32 3, %v1288
    %v1290 = vrot.slane %v1199, %v1289
    %v1291 = vlaneseq
    %v1292 = vshrl.u32 %v1291, 7
    %v1293 = vsub.s32 3, %v1292
    %v1294 = vrot.slane %v1200, %v1293
    %v1295 = vlaneseq
    %v1296 = vshrl.u32 %v1295, 7
    %v1297 = vsub.s32 3, %v1296
    %v1298 = vrot.slane %v1201, %v1297
    %v1299 = vlaneseq
    %v1300 = vshrl.u32 %v1299, 7
    %v1301 = vsub.s32 3, %v1300
    %v1302 = vrot.slane %v1202, %v1301
    %v1303 = vmul.f32 %v1286, %v1058
    %v1304 = vmul.f32 %v1290, %v1059
    %v1305 = vmul.f32 %v1294, %v1060
    %v1306 = vmul.f32 %v1298, %v1061
    %v1307 = vmul.f32 %v1302, %v1062
    %v1313 = vrot.slane %v1303, 5
    %v1314 = vrot.slane %v1304, 5
    %v1315 = vrot.slane %v1305, 5
    %v1316 = vrot.slane %v1306, 5
    %v1317 = vrot.slane %v1307, 5
    %v1323 = vadd.f32 %v1278, %v1313
    %v1324 = vadd.f32 %v1279, %v1314
    %v1325 = vadd.f32 %v1280, %v1315
    %v1326 = vadd.f32 %v1281, %v1316
    %v1327 = vadd.f32 %v1282, %v1317
    %v1328 = vlaneseq
    %v1329 = vshrl.u32 %v1328, 7
    %v1330 = vsub.s32 2, %v1329
    %v1331 = vrot.slane %v1028, %v1330
    %v1332 = vlaneseq
    %v1333 = vshrl.u32 %v1332, 7
    %v1334 = vsub.s32 2, %v1333
    %v1335 = vrot.slane %v1029, %v1334
    %v1336 = vlaneseq
    %v1337 = vshrl.u32 %v1336, 7
    %v1338 = vsub.s32 2, %v1337
    %v1339 = vrot.slane %v1030, %v1338
    %v1340 = vlaneseq
    %v1341 = vshrl.u32 %v1340, 7
    %v1342 = vsub.s32 2, %v1341
    %v1343 = vrot.slane %v1031, %v1342
    %v1344 = vlaneseq
    %v1345 = vshrl.u32 %v1344, 7
    %v1346 = vsub.s32 2, %v1345
    %v1347 = vrot.slane %v1032, %v1346
    %v1348 = vmul.f32 %v1331, %v1058
    %v1349 = vmul.f32 %v1335, %v1059
    %v1350 = vmul.f32 %v1339, %v1060
    %v1351 = vmul.f32 %v1343, %v1061
    %v1352 = vmul.f32 %v1347, %v1062
    %v1353 = vrot.slane %v32, 4
    %v1354 = vrot.slane %v33, 4
    %v1355 = vrot.slane %v34, 4
    %v1356 = vrot.slane %v35, 4
    %v1357 = vrot.slane %v36, 4
    %v1363 = vmul.f32 %v1348, %v1353
    %v1364 = vmul.f32 %v1349, %v1354
    %v1365 = vmul.f32 %v1350, %v1355
    %v1366 = vmul.f32 %v1351, %v1356
    %v1367 = vmul.f32 %v1352, %v1357
    %v1368 = vrot.slane %v32, 2
    %v1369 = vrot.slane %v33, 2
    %v1370 = vrot.slane %v34, 2
    %v1371 = vrot.slane %v35, 2
    %v1372 = vrot.slane %v36, 2
    %v1378 = vmul.f32 %v1348, %v1368
    %v1379 = vmul.f32 %v1349, %v1369
    %v1380 = vmul.f32 %v1350, %v1370
    %v1381 = vmul.f32 %v1351, %v1371
    %v1382 = vmul.f32 %v1352, %v1372
    %v1388 = vrot.slane %v1378, 1
    %v1389 = vrot.slane %v1379, 1
    %v1390 = vrot.slane %v1380, 1
    %v1391 = vrot.slane %v1381, 1
    %v1392 = vrot.slane %v1382, 1
    %v1398 = vsub.f32 %v1363, %v1388
    %v1399 = vsub.f32 %v1364, %v1389
    %v1400 = vsub.f32 %v1365, %v1390
    %v1401 = vsub.f32 %v1366, %v1391
    %v1402 = vsub.f32 %v1367, %v1392
    %v1408 = vrot.slane %v1398, 1
    %v1409 = vrot.slane %v1399, 1
    %v1410 = vrot.slane %v1400, 1
    %v1411 = vrot.slane %v1401, 1
    %v1412 = vrot.slane %v1402, 1
    %v1418 = vadd.f32 %v1253, %v1408
    %v1419 = vadd.f32 %v1254, %v1409
    %v1420 = vadd.f32 %v1255, %v1410
    %v1421 = vadd.f32 %v1256, %v1411
    %v1422 = vadd.f32 %v1257, %v1412
    %v1428 = vcombine.low %v1418, %v1419
    %v1429 = vcombine.low %v1420, %v1421
    %v1431 = vunpack.c.l.s4 1966171168
    %v1432 = vunpack.c.0.s8 %v1431
    %v1433 = vlaneseq
    %v1434 = vshrl.u32 %v1433, 7
    %v1435 = vsub.s32 %v1432, %v1434
    %v1436 = vrot.slane %v1428, %v1435
    %v1438 = vunpack.c.l.s4 1966171168
    %v1439 = vunpack.c.0.s8 %v1438
    %v1440 = vlaneseq
    %v1441 = vshrl.u32 %v1440, 7
    %v1442 = vsub.s32 %v1439, %v1441
    %v1443 = vrot.slane %v1429, %v1442
    %v1445 = vunpack.c.l.s4 1966171168
    %v1446 = vunpack.c.0.s8 %v1445
    %v1447 = vlaneseq
    %v1448 = vshrl.u32 %v1447, 7
    %v1449 = vsub.s32 %v1446, %v1448
    %v1450 = vrot.slane %v1422, %v1449
    %v1451 = vcombine.low %v1436, %v1443
    %v1453 = vunpack.c.l.s4 1966171168
    %v1454 = vunpack.c.0.s8 %v1453
    %v1455 = vlaneseq
    %v1456 = vshrl.u32 %v1455, 7
    %v1457 = vsub.s32 %v1454, %v1456
    %v1458 = vrot.slane %v1451, %v1457
    %v1460 = vunpack.c.l.s4 1966171168
    %v1461 = vunpack.c.0.s8 %v1460
    %v1462 = vlaneseq
    %v1463 = vshrl.u32 %v1462, 7
    %v1464 = vsub.s32 %v1461, %v1463
    %v1465 = vrot.slane %v1450, %v1464
    %v1466 = vcombine.low %v1458, %v1465
    %v1468 = vlaneseq
    %vm1469 = vcmp.ge.s32.totalorder %v1468, 0
    %vm1470 = vcmp.lt.s32.totalorder %v1468, 640
    %vm1471 = vmand %vm1469, %vm1470
    %1472 = vst.msk [vmem:[#allocation2] ss:$8 sm:$0xf] %vm1471, %v1466
    %1473 = vst.msk [vmem:[#allocation2] ss:$8 sm:$0x10] %vm1471, %v1466
    %v1474 = vrot.slane %v32, 1
    %v1475 = vrot.slane %v33, 1
    %v1476 = vrot.slane %v34, 1
    %v1477 = vrot.slane %v35, 1
    %v1478 = vrot.slane %v36, 1
    %v1484 = vmul.f32 %v1348, %v1474
    %v1485 = vmul.f32 %v1349, %v1475
    %v1486 = vmul.f32 %v1350, %v1476
    %v1487 = vmul.f32 %v1351, %v1477
    %v1488 = vmul.f32 %v1352, %v1478
    %v1489 = vrot.slane %v32, 5
    %v1490 = vrot.slane %v33, 5
    %v1491 = vrot.slane %v34, 5
    %v1492 = vrot.slane %v35, 5
    %v1493 = vrot.slane %v36, 5
    %v1499 = vmul.f32 %v1348, %v1489
    %v1500 = vmul.f32 %v1349, %v1490
    %v1501 = vmul.f32 %v1350, %v1491
    %v1502 = vmul.f32 %v1351, %v1492
    %v1503 = vmul.f32 %v1352, %v1493
    %v1509 = vrot.slane %v1499, 6
    %v1510 = vrot.slane %v1500, 6
    %v1511 = vrot.slane %v1501, 6
    %v1512 = vrot.slane %v1502, 6
    %v1513 = vrot.slane %v1503, 6
    %v1519 = vsub.f32 %v1484, %v1509
    %v1520 = vsub.f32 %v1485, %v1510
    %v1521 = vsub.f32 %v1486, %v1511
    %v1522 = vsub.f32 %v1487, %v1512
    %v1523 = vsub.f32 %v1488, %v1513
    %v1529 = vrot.slane %v1519, 1
    %v1530 = vrot.slane %v1520, 1
    %v1531 = vrot.slane %v1521, 1
    %v1532 = vrot.slane %v1522, 1
    %v1533 = vrot.slane %v1523, 1
    %v1539 = vadd.f32 %v1253, %v1529
    %v1540 = vadd.f32 %v1254, %v1530
    %v1541 = vadd.f32 %v1255, %v1531
    %v1542 = vadd.f32 %v1256, %v1532
    %v1543 = vadd.f32 %v1257, %v1533
    %v1549 = vcombine.low %v1539, %v1540
    %v1550 = vcombine.low %v1541, %v1542
    %v1552 = vunpack.c.l.s4 1966171168
    %v1553 = vunpack.c.0.s8 %v1552
    %v1554 = vlaneseq
    %v1555 = vshrl.u32 %v1554, 7
    %v1556 = vsub.s32 %v1553, %v1555
    %v1557 = vrot.slane %v1549, %v1556
    %v1559 = vunpack.c.l.s4 1966171168
    %v1560 = vunpack.c.0.s8 %v1559
    %v1561 = vlaneseq
    %v1562 = vshrl.u32 %v1561, 7
    %v1563 = vsub.s32 %v1560, %v1562
    %v1564 = vrot.slane %v1550, %v1563
    %v1566 = vunpack.c.l.s4 1966171168
    %v1567 = vunpack.c.0.s8 %v1566
    %v1568 = vlaneseq
    %v1569 = vshrl.u32 %v1568, 7
    %v1570 = vsub.s32 %v1567, %v1569
    %v1571 = vrot.slane %v1543, %v1570
    %v1572 = vcombine.high %v1557, %v1564
    %v1573 = vcombine.high %v1571, %v1571
    %v1575 = vunpack.c.l.s4 1966171168
    %v1576 = vunpack.c.0.s8 %v1575
    %v1577 = vlaneseq
    %v1578 = vshrl.u32 %v1577, 7
    %v1579 = vsub.s32 %v1576, %v1578
    %v1580 = vrot.slane %v1572, %v1579
    %v1582 = vunpack.c.l.s4 1966171168
    %v1583 = vunpack.c.0.s8 %v1582
    %v1584 = vlaneseq
    %v1585 = vshrl.u32 %v1584, 7
    %v1586 = vsub.s32 %v1583, %v1585
    %v1587 = vrot.slane %v1573, %v1586
    %v1588 = vcombine.low %v1580, %v1587
    %s1590 = scalar_lea.vmem [#allocation2], 1
    %1591 = vst.msk [vmem:[%s1590] ss:$8 sm:$0xf] %vm1471, %v1588
    %1592 = vst.msk [vmem:[%s1590] ss:$8 sm:$0x10] %vm1471, %v1588
    %v1593 = vrot.slane %v1398, 6
    %v1594 = vrot.slane %v1399, 6
    %v1595 = vrot.slane %v1400, 6
    %v1596 = vrot.slane %v1401, 6
    %v1597 = vrot.slane %v1402, 6
    %v1603 = vadd.f32 %v1253, %v1593
    %v1604 = vadd.f32 %v1254, %v1594
    %v1605 = vadd.f32 %v1255, %v1595
    %v1606 = vadd.f32 %v1256, %v1596
    %v1607 = vadd.f32 %v1257, %v1597
    %v1613 = vcombine.low %v1603, %v1604
    %v1614 = vcombine.low %v1605, %v1606
    %v1616 = vunpack.c.l.s4 1966171168
    %v1617 = vunpack.c.0.s8 %v1616
    %v1618 = vlaneseq
    %v1619 = vshrl.u32 %v1618, 7
    %v1620 = vsub.s32 %v1617, %v1619
    %v1621 = vrot.slane %v1613, %v1620
    %v1623 = vunpack.c.l.s4 1966171168
    %v1624 = vunpack.c.0.s8 %v1623
    %v1625 = vlaneseq
    %v1626 = vshrl.u32 %v1625, 7
    %v1627 = vsub.s32 %v1624, %v1626
    %v1628 = vrot.slane %v1614, %v1627
    %v1630 = vunpack.c.l.s4 1966171168
    %v1631 = vunpack.c.0.s8 %v1630
    %v1632 = vlaneseq
    %v1633 = vshrl.u32 %v1632, 7
    %v1634 = vsub.s32 %v1631, %v1633
    %v1635 = vrot.slane %v1607, %v1634
    %v1636 = vcombine.low %v1621, %v1628
    %v1638 = vunpack.c.l.s4 1966171168
    %v1639 = vunpack.c.0.s8 %v1638
    %v1640 = vlaneseq
    %v1641 = vshrl.u32 %v1640, 7
    %v1642 = vsub.s32 %v1639, %v1641
    %v1643 = vrot.slane %v1636, %v1642
    %v1645 = vunpack.c.l.s4 1966171168
    %v1646 = vunpack.c.0.s8 %v1645
    %v1647 = vlaneseq
    %v1648 = vshrl.u32 %v1647, 7
    %v1649 = vsub.s32 %v1646, %v1648
    %v1650 = vrot.slane %v1635, %v1649
    %v1651 = vcombine.high %v1643, %v1650
    %s1653 = scalar_lea.vmem [#allocation2], 2
    %1654 = vst.msk [vmem:[%s1653] ss:$8 sm:$0xf] %vm1471, %v1651
    %1655 = vst.msk [vmem:[%s1653] ss:$8 sm:$0x10] %vm1471, %v1651
    %v1661 = vrot.slane %v1348, 1
    %v1662 = vrot.slane %v1349, 1
    %v1663 = vrot.slane %v1350, 1
    %v1664 = vrot.slane %v1351, 1
    %v1665 = vrot.slane %v1352, 1
    %v1671 = vmul.f32 %v32, %v1661
    %v1672 = vmul.f32 %v33, %v1662
    %v1673 = vmul.f32 %v34, %v1663
    %v1674 = vmul.f32 %v35, %v1664
    %v1675 = vmul.f32 %v36, %v1665
    %v1676 = vrot.slane %v1348, 7
    %v1677 = vrot.slane %v1349, 7
    %v1678 = vrot.slane %v1350, 7
    %v1679 = vrot.slane %v1351, 7
    %v1680 = vrot.slane %v1352, 7
    %v1686 = vmul.f32 %v32, %v1676
    %v1687 = vmul.f32 %v33, %v1677
    %v1688 = vmul.f32 %v34, %v1678
    %v1689 = vmul.f32 %v35, %v1679
    %v1690 = vmul.f32 %v36, %v1680
    %v1696 = vrot.slane %v1686, 1
    %v1697 = vrot.slane %v1687, 1
    %v1698 = vrot.slane %v1688, 1
    %v1699 = vrot.slane %v1689, 1
    %v1700 = vrot.slane %v1690, 1
    %v1706 = vsub.f32 %v1671, %v1696
    %v1707 = vsub.f32 %v1672, %v1697
    %v1708 = vsub.f32 %v1673, %v1698
    %v1709 = vsub.f32 %v1674, %v1699
    %v1710 = vsub.f32 %v1675, %v1700
    %v1716 = vrot.slane %v1706, 6
    %v1717 = vrot.slane %v1707, 6
    %v1718 = vrot.slane %v1708, 6
    %v1719 = vrot.slane %v1709, 6
    %v1720 = vrot.slane %v1710, 6
    %v1726 = vadd.f32 %v1323, %v1716
    %v1727 = vadd.f32 %v1324, %v1717
    %v1728 = vadd.f32 %v1325, %v1718
    %v1729 = vadd.f32 %v1326, %v1719
    %v1730 = vadd.f32 %v1327, %v1720
    %v1736 = vcombine.low %v1726, %v1727
    %v1737 = vcombine.low %v1728, %v1729
    %v1739 = vunpack.c.l.s4 1966171168
    %v1740 = vunpack.c.0.s8 %v1739
    %v1741 = vlaneseq
    %v1742 = vshrl.u32 %v1741, 7
    %v1743 = vsub.s32 %v1740, %v1742
    %v1744 = vrot.slane %v1736, %v1743
    %v1746 = vunpack.c.l.s4 1966171168
    %v1747 = vunpack.c.0.s8 %v1746
    %v1748 = vlaneseq
    %v1749 = vshrl.u32 %v1748, 7
    %v1750 = vsub.s32 %v1747, %v1749
    %v1751 = vrot.slane %v1737, %v1750
    %v1753 = vunpack.c.l.s4 1966171168
    %v1754 = vunpack.c.0.s8 %v1753
    %v1755 = vlaneseq
    %v1756 = vshrl.u32 %v1755, 7
    %v1757 = vsub.s32 %v1754, %v1756
    %v1758 = vrot.slane %v1730, %v1757
    %v1759 = vcombine.high %v1744, %v1751
    %v1760 = vcombine.high %v1758, %v1758
    %v1762 = vunpack.c.l.s4 1966171168
    %v1763 = vunpack.c.0.s8 %v1762
    %v1764 = vlaneseq
    %v1765 = vshrl.u32 %v1764, 7
    %v1766 = vsub.s32 %v1763, %v1765
    %v1767 = vrot.slane %v1759, %v1766
    %v1769 = vunpack.c.l.s4 1966171168
    %v1770 = vunpack.c.0.s8 %v1769
    %v1771 = vlaneseq
    %v1772 = vshrl.u32 %v1771, 7
    %v1773 = vsub.s32 %v1770, %v1772
    %v1774 = vrot.slane %v1760, %v1773
    %v1775 = vcombine.high %v1767, %v1774
    %s1777 = scalar_lea.vmem [#allocation2], 3
    %1778 = vst.msk [vmem:[%s1777] ss:$8 sm:$0xf] %vm1471, %v1775
    %1779 = vst.msk [vmem:[%s1777] ss:$8 sm:$0x10] %vm1471, %v1775
    %v1780 = vrot.slane %v1348, 6
    %v1781 = vrot.slane %v1349, 6
    %v1782 = vrot.slane %v1350, 6
    %v1783 = vrot.slane %v1351, 6
    %v1784 = vrot.slane %v1352, 6
    %v1790 = vmul.f32 %v32, %v1780
    %v1791 = vmul.f32 %v33, %v1781
    %v1792 = vmul.f32 %v34, %v1782
    %v1793 = vmul.f32 %v35, %v1783
    %v1794 = vmul.f32 %v36, %v1784
    %v1795 = vrot.slane %v1348, 2
    %v1796 = vrot.slane %v1349, 2
    %v1797 = vrot.slane %v1350, 2
    %v1798 = vrot.slane %v1351, 2
    %v1799 = vrot.slane %v1352, 2
    %v1805 = vmul.f32 %v32, %v1795
    %v1806 = vmul.f32 %v33, %v1796
    %v1807 = vmul.f32 %v34, %v1797
    %v1808 = vmul.f32 %v35, %v1798
    %v1809 = vmul.f32 %v36, %v1799
    %v1815 = vrot.slane %v1805, 6
    %v1816 = vrot.slane %v1806, 6
    %v1817 = vrot.slane %v1807, 6
    %v1818 = vrot.slane %v1808, 6
    %v1819 = vrot.slane %v1809, 6
    %v1825 = vsub.f32 %v1790, %v1815
    %v1826 = vsub.f32 %v1791, %v1816
    %v1827 = vsub.f32 %v1792, %v1817
    %v1828 = vsub.f32 %v1793, %v1818
    %v1829 = vsub.f32 %v1794, %v1819
    %v1835 = vrot.slane %v1825, 6
    %v1836 = vrot.slane %v1826, 6
    %v1837 = vrot.slane %v1827, 6
    %v1838 = vrot.slane %v1828, 6
    %v1839 = vrot.slane %v1829, 6
    %v1845 = vadd.f32 %v1323, %v1835
    %v1846 = vadd.f32 %v1324, %v1836
    %v1847 = vadd.f32 %v1325, %v1837
    %v1848 = vadd.f32 %v1326, %v1838
    %v1849 = vadd.f32 %v1327, %v1839
    %v1855 = vcombine.high %v1845, %v1846
    %v1856 = vcombine.high %v1847, %v1848
    %v1857 = vcombine.high %v1849, %v1849
    %v1859 = vunpack.c.l.s4 1966171168
    %v1860 = vunpack.c.0.s8 %v1859
    %v1861 = vlaneseq
    %v1862 = vshrl.u32 %v1861, 7
    %v1863 = vsub.s32 %v1860, %v1862
    %v1864 = vrot.slane %v1855, %v1863
    %v1866 = vunpack.c.l.s4 1966171168
    %v1867 = vunpack.c.0.s8 %v1866
    %v1868 = vlaneseq
    %v1869 = vshrl.u32 %v1868, 7
    %v1870 = vsub.s32 %v1867, %v1869
    %v1871 = vrot.slane %v1856, %v1870
    %v1873 = vunpack.c.l.s4 1966171168
    %v1874 = vunpack.c.0.s8 %v1873
    %v1875 = vlaneseq
    %v1876 = vshrl.u32 %v1875, 7
    %v1877 = vsub.s32 %v1874, %v1876
    %v1878 = vrot.slane %v1857, %v1877
    %v1879 = vcombine.low %v1864, %v1871
    %v1881 = vunpack.c.l.s4 1966171168
    %v1882 = vunpack.c.0.s8 %v1881
    %v1883 = vlaneseq
    %v1884 = vshrl.u32 %v1883, 7
    %v1885 = vsub.s32 %v1882, %v1884
    %v1886 = vrot.slane %v1879, %v1885
    %v1888 = vunpack.c.l.s4 1966171168
    %v1889 = vunpack.c.0.s8 %v1888
    %v1890 = vlaneseq
    %v1891 = vshrl.u32 %v1890, 7
    %v1892 = vsub.s32 %v1889, %v1891
    %v1893 = vrot.slane %v1878, %v1892
    %v1894 = vcombine.low %v1886, %v1893
    %s1896 = scalar_lea.vmem [#allocation2], 4
    %1897 = vst.msk [vmem:[%s1896] ss:$8 sm:$0xf] %vm1471, %v1894
    %1898 = vst.msk [vmem:[%s1896] ss:$8 sm:$0x10] %vm1471, %v1894
    %v1899 = vrot.slane %v1706, 3
    %v1900 = vrot.slane %v1707, 3
    %v1901 = vrot.slane %v1708, 3
    %v1902 = vrot.slane %v1709, 3
    %v1903 = vrot.slane %v1710, 3
    %v1909 = vadd.f32 %v1323, %v1899
    %v1910 = vadd.f32 %v1324, %v1900
    %v1911 = vadd.f32 %v1325, %v1901
    %v1912 = vadd.f32 %v1326, %v1902
    %v1913 = vadd.f32 %v1327, %v1903
    %v1919 = vcombine.high %v1909, %v1910
    %v1920 = vcombine.high %v1911, %v1912
    %v1921 = vcombine.high %v1913, %v1913
    %v1923 = vunpack.c.l.s4 1966171168
    %v1924 = vunpack.c.0.s8 %v1923
    %v1925 = vlaneseq
    %v1926 = vshrl.u32 %v1925, 7
    %v1927 = vsub.s32 %v1924, %v1926
    %v1928 = vrot.slane %v1919, %v1927
    %v1930 = vunpack.c.l.s4 1966171168
    %v1931 = vunpack.c.0.s8 %v1930
    %v1932 = vlaneseq
    %v1933 = vshrl.u32 %v1932, 7
    %v1934 = vsub.s32 %v1931, %v1933
    %v1935 = vrot.slane %v1920, %v1934
    %v1937 = vunpack.c.l.s4 1966171168
    %v1938 = vunpack.c.0.s8 %v1937
    %v1939 = vlaneseq
    %v1940 = vshrl.u32 %v1939, 7
    %v1941 = vsub.s32 %v1938, %v1940
    %v1942 = vrot.slane %v1921, %v1941
    %v1943 = vcombine.high %v1928, %v1935
    %v1944 = vcombine.high %v1942, %v1942
    %v1946 = vunpack.c.l.s4 1966171168
    %v1947 = vunpack.c.0.s8 %v1946
    %v1948 = vlaneseq
    %v1949 = vshrl.u32 %v1948, 7
    %v1950 = vsub.s32 %v1947, %v1949
    %v1951 = vrot.slane %v1943, %v1950
    %v1953 = vunpack.c.l.s4 1966171168
    %v1954 = vunpack.c.0.s8 %v1953
    %v1955 = vlaneseq
    %v1956 = vshrl.u32 %v1955, 7
    %v1957 = vsub.s32 %v1954, %v1956
    %v1958 = vrot.slane %v1944, %v1957
    %v1959 = vcombine.low %v1951, %v1958
    %s1961 = scalar_lea.vmem [#allocation2], 5
    %1962 = vst.msk [vmem:[%s1961] ss:$8 sm:$0xf] %vm1471, %v1959
    %1963 = vst.msk [vmem:[%s1961] ss:$8 sm:$0x10] %vm1471, %v1959
    // Predicated region
    $region30: #{tpu_custom_call.1} parent=1 // pred_check
      _
    $region31: #{tpu_custom_call.1} parent=1 // pred_check_branch
      %1965 = sbr.rel (0) target = $region33
    $region32: #{tpu_custom_call.1} parent=1 // pred_region
      %s1967 = ssub.s32 640, 640
      %1968 = vsyncadd [#allocation3], %s1967
      %s1970 = sshll.u32 [#allocation2], 4
      %s1971 = int_to_ptr.vmem [resolvable:$true] %s1970
      %1973 = dma.vmem_to_hbm [thread:$0]  %s1971, 640, %s7, [#allocation3]
    $region33: #{tpu_custom_call.1} parent=1 // pred_fallthru
      _
    // Predicated region
    $region34: #{tpu_custom_call.1} parent=1 // pred_check
      _
    $region35: #{tpu_custom_call.1} parent=1 // pred_check_branch
      %1975 = sbr.rel (0) target = $region37
    $region36: #{tpu_custom_call.1} parent=1 // pred_region
      %1976 = dma.done [#allocation3], 640
    $region37: #{tpu_custom_call.1} parent=1 // pred_fallthru
      _
    %1977 = vsyncpa [#allocation3], 1

</llo_original>
